<compile_context>
chip_gen: v7x
topology: tpu7x:2x2x1
jax: 0.10.0
libtpu: 0.0.40
codegen_flags: <defaults>
</compile_context>

<pallas_src>
import functools

import jax
import jax.numpy as jnp
from jax.experimental import pallas as pl
from jax.experimental.pallas import tpu as pltpu

# ---- synthetic "kcbert" config (small, deterministic) ----
VOCAB = 128
HIDDEN = 32
N_LAYERS = 2
N_HEADS = 2
HEAD_DIM = HIDDEN // N_HEADS
INTERMEDIATE = 64
MAX_POS = 16
TYPE_VOCAB = 2
LN_EPS = 1e-12          # BertLayerNorm eps
NUM_LABELS = 2          # nn.Linear(hidden_size, 2)
LANE = 128              # lane-dense padding for the classifier output


# --------------------------- in-kernel helpers -------------------------------
def _layernorm(x, g, b):
    mean = jnp.mean(x, axis=-1, keepdims=True)
    var = jnp.mean((x - mean) ** 2, axis=-1, keepdims=True)
    return (x - mean) * jax.lax.rsqrt(var + LN_EPS) * g + b


def _erf(x):
    # Abramowitz & Stegun 7.1.26 (|err| <= 1.5e-7): keeps exact-erf GELU semantics
    # while lowering to exp/mul/add only (guaranteed Mosaic-supported ops).
    p = 0.3275911
    a1, a2, a3, a4, a5 = (0.254829592, -0.284496736, 1.421413741,
                          -1.453152027, 1.061405429)
    sgn = jnp.where(x >= 0.0, 1.0, -1.0)
    ax = jnp.abs(x)
    t = 1.0 / (1.0 + p * ax)
    poly = ((((a5 * t + a4) * t + a3) * t + a2) * t + a1) * t
    return sgn * (1.0 - poly * jnp.exp(-ax * ax))


def _gelu_exact(x):
    return 0.5 * x * (1.0 + _erf(x * 0.7071067811865476))


# --------------------------- fused encoder kernel ----------------------------
def _encoder_kernel(x_in_ref, bias_ref, emb_g_ref, emb_b_ref,
                    wqkv_ref, bqkv_ref, wo_ref, bo_ref,
                    ln1_g_ref, ln1_b_ref, w1_ref, b1_ref,
                    w2_ref, b2_ref, ln2_g_ref, ln2_b_ref,
                    out_ref, *, batch, seq, n_heads, head_dim):
    layer = pl.program_id(0)
    hidden = n_heads * head_dim

    # Layer 0: apply the embedding LayerNorm once and seed the resident
    # activation slab carried in VMEM across all grid steps.
    @pl.when(layer == 0)
    def _():
        out_ref[...] = _layernorm(x_in_ref[...], emb_g_ref[...], emb_b_ref[...])

    x = out_ref[...]                                       # (T, H), T = B*S

    # ---- fused QKV projection: one MXU matmul against (H, 3H) ----
    qkv = (jnp.dot(x, wqkv_ref[0], preferred_element_type=jnp.float32)
           + bqkv_ref[0])                                  # (T, 3H)

    bias = bias_ref[...]                                   # (B, 1, S) additive mask
    scale = 1.0 / float(head_dim) ** 0.5

    # ---- attention: batched over B via einsum, heads statically unrolled ----
    attn = bo_ref[0]                                       # (1, H), broadcasts to (T, H)
    for h in range(n_heads):
        c0 = h * head_dim
        q = qkv[:, c0:c0 + head_dim].reshape(batch, seq, head_dim)
        k = qkv[:, hidden + c0:hidden + c0 + head_dim].reshape(batch, seq, head_dim)
        v = qkv[:, 2 * hidden + c0:2 * hidden + c0 + head_dim].reshape(batch, seq, head_dim)

        sc = jnp.einsum("bqd,bkd->bqk", q, k,
                        preferred_element_type=jnp.float32) * scale + bias
        m = jnp.max(sc, axis=-1, keepdims=True)
        p = jnp.exp(sc - m)
        p = p * pl.reciprocal(jnp.sum(p, axis=-1, keepdims=True), approx=True)
        ctx = jnp.einsum("bqk,bkd->bqd", p, v,
                         preferred_element_type=jnp.float32)
        ctx2 = ctx.reshape(batch * seq, head_dim)          # (T, Dh)
        # (concat_h ctx_h) @ Wo  ==  sum_h ctx_h @ Wo[h*Dh:(h+1)*Dh, :]
        attn = attn + jnp.dot(ctx2, wo_ref[0][c0:c0 + head_dim, :],
                              preferred_element_type=jnp.float32)

    # ---- residual + LayerNorm 1 (f32 math) ----
    x = _layernorm(x + attn, ln1_g_ref[0], ln1_b_ref[0])

    # ---- FFN with fused exact-erf GELU ----
    hmid = _gelu_exact(jnp.dot(x, w1_ref[0], preferred_element_type=jnp.float32)
                       + b1_ref[0])
    ffn = jnp.dot(hmid, w2_ref[0], preferred_element_type=jnp.float32) + b2_ref[0]

    # ---- residual + LayerNorm 2; write back into the resident slab ----
    out_ref[...] = _layernorm(x + ffn, ln2_g_ref[0], ln2_b_ref[0])


def encoder_pallas(x_emb, attn_bias, params):
    """x_emb: (B*S, H) summed embeddings (pre-LN); attn_bias: (B, 1, S)."""
    t, hdim = x_emb.shape
    b, _, s = attn_bias.shape
    enc = params["enc"]

    kern = functools.partial(_encoder_kernel, batch=b, seq=s,
                             n_heads=N_HEADS, head_dim=HEAD_DIM)

    def rep(shape):          # replicated (same block) across the layer grid
        return pl.BlockSpec(shape, lambda l, _n=len(shape): (0,) * _n)

    def per_layer(a):        # stacked (L, ...) tensor: pick layer l
        return pl.BlockSpec((1,) + a.shape[1:], lambda l: (l, 0, 0))

    ordered = [enc["wqkv"], enc["bqkv"], enc["wo"], enc["bo"],
               enc["ln1_g"], enc["ln1_b"], enc["w1"], enc["b1"],
               enc["w2"], enc["b2"], enc["ln2_g"], enc["ln2_b"]]

    return pl.pallas_call(
        kern,
        out_shape=jax.ShapeDtypeStruct((t, hdim), jnp.float32),
        grid=(N_LAYERS,),
        in_specs=[rep((t, hdim)), rep((b, 1, s)),
                  rep((1, hdim)), rep((1, hdim))]
                 + [per_layer(a) for a in ordered],
        out_specs=pl.BlockSpec((t, hdim), lambda l: (0, 0)),   # resident across layers
        compiler_params=pltpu.CompilerParams(
            dimension_semantics=("arbitrary",)),               # sequential layer loop
    )(x_emb, attn_bias, params["emb_ln_g"], params["emb_ln_b"], *ordered)


# --------------------------- fused pooler + classifier -----------------------
def _pooler_cls_kernel(x_ref, wp_ref, bp_ref, wc_ref, bc_ref, o_ref):
    pooled = jnp.tanh(jnp.dot(x_ref[...], wp_ref[...],
                              preferred_element_type=jnp.float32) + bp_ref[...])
    o_ref[...] = (jnp.dot(pooled, wc_ref[...],
                          preferred_element_type=jnp.float32) + bc_ref[...])


def pooler_classifier_pallas(cls_tokens, wp, bp, wc_pad, bc_pad):
    b, h = cls_tokens.shape
    n_out = wc_pad.shape[1]                                # lane-dense (128) output
    return pl.pallas_call(
        _pooler_cls_kernel,
        out_shape=jax.ShapeDtypeStruct((b, n_out), jnp.float32),
        grid=(1,),
        in_specs=[
            pl.BlockSpec((b, h), lambda i: (0, 0)),
            pl.BlockSpec((h, h), lambda i: (0, 0)),
            pl.BlockSpec((1, h), lambda i: (0, 0)),
            pl.BlockSpec((h, n_out), lambda i: (0, 0)),
            pl.BlockSpec((1, n_out), lambda i: (0, 0)),
        ],
        out_specs=pl.BlockSpec((b, n_out), lambda i: (0, 0)),
    )(cls_tokens, wp, bp.reshape(1, h), wc_pad, bc_pad)


# --------------------------- parameter init ----------------------------------
def init_params(key):
    def dense(k, d_in, d_out):
        kw, _ = jax.random.split(k)
        return (0.02 * jax.random.normal(kw, (d_in, d_out), jnp.float32),
                jnp.zeros((d_out,), jnp.float32))

    keys = jax.random.split(key, 8 + N_LAYERS)
    params = {
        "word_emb": 0.02 * jax.random.normal(keys[0], (VOCAB, HIDDEN), jnp.float32),
        "pos_emb": 0.02 * jax.random.normal(keys[1], (MAX_POS, HIDDEN), jnp.float32),
        "type_emb": 0.02 * jax.random.normal(keys[2], (TYPE_VOCAB, HIDDEN), jnp.float32),
        "emb_ln_g": jnp.ones((1, HIDDEN), jnp.float32),
        "emb_ln_b": jnp.zeros((1, HIDDEN), jnp.float32),
    }
    params["pooler_w"], params["pooler_b"] = dense(keys[3], HIDDEN, HIDDEN)
    cls_w, cls_b = dense(keys[4], HIDDEN, NUM_LABELS)
    # classifier weights padded to 128 output lanes (extra columns are exact zeros)
    params["cls_w_pad"] = (jnp.zeros((HIDDEN, LANE), jnp.float32)
                           .at[:, :NUM_LABELS].set(cls_w))
    params["cls_b_pad"] = (jnp.zeros((1, LANE), jnp.float32)
                           .at[:, :NUM_LABELS].set(cls_b))

    # per-layer params, stacked with a leading layer dim for the fused encoder grid
    wqkv, bqkv, wo, bo = [], [], [], []
    ln1_g, ln1_b, w1, b1, w2, b2, ln2_g, ln2_b = ([] for _ in range(8))
    for li in range(N_LAYERS):
        lk = jax.random.split(keys[8 + li], 6)
        wq, bq = dense(lk[0], HIDDEN, HIDDEN)
        wk, bk = dense(lk[1], HIDDEN, HIDDEN)
        wv, bv = dense(lk[2], HIDDEN, HIDDEN)
        wo_i, bo_i = dense(lk[3], HIDDEN, HIDDEN)
        w1_i, b1_i = dense(lk[4], HIDDEN, INTERMEDIATE)
        w2_i, b2_i = dense(lk[5], INTERMEDIATE, HIDDEN)
        wqkv.append(jnp.concatenate([wq, wk, wv], axis=1))          # (H, 3H)
        bqkv.append(jnp.concatenate([bq, bk, bv])[None, :])         # (1, 3H)
        wo.append(wo_i)
        bo.append(bo_i[None, :])
        ln1_g.append(jnp.ones((1, HIDDEN), jnp.float32))
        ln1_b.append(jnp.zeros((1, HIDDEN), jnp.float32))
        w1.append(w1_i)
        b1.append(b1_i[None, :])
        w2.append(w2_i)
        b2.append(b2_i[None, :])
        ln2_g.append(jnp.ones((1, HIDDEN), jnp.float32))
        ln2_b.append(jnp.zeros((1, HIDDEN), jnp.float32))

    params["enc"] = {
        "wqkv": jnp.stack(wqkv), "bqkv": jnp.stack(bqkv),
        "wo": jnp.stack(wo), "bo": jnp.stack(bo),
        "ln1_g": jnp.stack(ln1_g), "ln1_b": jnp.stack(ln1_b),
        "w1": jnp.stack(w1), "b1": jnp.stack(b1),
        "w2": jnp.stack(w2), "b2": jnp.stack(b2),
        "ln2_g": jnp.stack(ln2_g), "ln2_b": jnp.stack(ln2_b),
    }
    return params


# --------------------------- forward pass -------------------------------------
def kcbert_forward(params, input_ids, attention_mask=None, token_type_ids=None):
    b, s = input_ids.shape
    if attention_mask is None:
        attention_mask = jnp.ones((b, s), jnp.float32)
    if token_type_ids is None:
        token_type_ids = jnp.zeros((b, s), jnp.int32)

    # --- embeddings (gathers = glue); LayerNorm is fused into the encoder kernel ---
    pos_ids = jnp.arange(s, dtype=jnp.int32)
    emb = (params["word_emb"][input_ids]
           + params["pos_emb"][pos_ids][None, :, :]
           + params["type_emb"][token_type_ids])
    x_emb = emb.reshape(b * s, HIDDEN)

    # additive attention bias (B, 1, S), broadcast over heads & query positions
    attn_bias = ((1.0 - attention_mask.astype(jnp.float32)) * -10000.0
                 ).reshape(b, 1, s)

    # --- one fused Pallas call: embedding LN + all encoder layers ---
    x = encoder_pallas(x_emb, attn_bias, params)

    # --- [CLS] slice (glue) -> fused pooler(tanh) + classifier kernel ---
    cls_tok = x.reshape(b, s, HIDDEN)[:, 0, :]
    logits_pad = pooler_classifier_pallas(cls_tok, params["pooler_w"],
                                          params["pooler_b"],
                                          params["cls_w_pad"], params["cls_b_pad"])
    return logits_pad[:, :NUM_LABELS]


# ------------------------------- main ------------------------------------------
if __name__ == "__main__":
    B, S = 2, 8
    key = jax.random.PRNGKey(0)
    k_param, k_ids = jax.random.split(key)

    params = init_params(k_param)
    input_ids = jax.random.randint(k_ids, (B, S), 0, VOCAB, dtype=jnp.int32)
    attention_mask = jnp.ones((B, S), jnp.float32).at[1, -2:].set(0.0)  # pad tail of sample 1
    token_type_ids = jnp.zeros((B, S), jnp.int32).at[:, S // 2:].set(1)

    forward = jax.jit(kcbert_forward)
    logits = forward(params, input_ids,
                     attention_mask=attention_mask,
                     token_type_ids=token_type_ids)
    jax.block_until_ready(logits)
    assert logits.shape == (B, NUM_LABELS)
    print("KERNEL_OK")
</pallas_src>

<mosaic_0001>
module attributes {stable_mosaic.version = 11 : i64} {
  func.func @_pooler_cls_kernel(%arg0: i32, %arg1: memref<2x32xf32, #tpu.memory_space<vmem>>, %arg2: memref<32x32xf32, #tpu.memory_space<vmem>>, %arg3: memref<1x32xf32, #tpu.memory_space<vmem>>, %arg4: memref<32x128xf32, #tpu.memory_space<vmem>>, %arg5: memref<1x128xf32, #tpu.memory_space<vmem>>, %arg6: memref<2x128xf32, #tpu.memory_space<vmem>>) attributes {dimension_semantics = [#tpu.dimension_semantics<arbitrary>], iteration_bounds = array<i64: 1>, scalar_prefetch = 0 : i64, scratch_operands = 0 : i64, tpu.core_type = #tpu.core_type<tc>, window_params = [{pipeline_mode = #tpu.pipeline_mode<synchronous>, transform_indices = @transform_0, window_bounds = array<i64: 2, 32>}, {pipeline_mode = #tpu.pipeline_mode<synchronous>, transform_indices = @transform_1, window_bounds = array<i64: 32, 32>}, {pipeline_mode = #tpu.pipeline_mode<synchronous>, transform_indices = @transform_2, window_bounds = array<i64: 1, 32>}, {pipeline_mode = #tpu.pipeline_mode<synchronous>, transform_indices = @transform_3, window_bounds = array<i64: 32, 128>}, {pipeline_mode = #tpu.pipeline_mode<synchronous>, transform_indices = @transform_4, window_bounds = array<i64: 1, 128>}, {pipeline_mode = #tpu.pipeline_mode<synchronous>, transform_indices = @transform_5, window_bounds = array<i64: 2, 128>}]} {
    %c0 = arith.constant 0 : index
    %c0_0 = arith.constant 0 : index
    %0 = vector.load %arg1[%c0, %c0_0] : memref<2x32xf32, #tpu.memory_space<vmem>>, vector<2x32xf32>
    %c0_1 = arith.constant 0 : index
    %c0_2 = arith.constant 0 : index
    %1 = vector.load %arg2[%c0_1, %c0_2] : memref<32x32xf32, #tpu.memory_space<vmem>>, vector<32x32xf32>
    %cst = arith.constant dense<0.000000e+00> : vector<2x32xf32>
    %2 = tpu.matmul %0, %1, %cst {dimension_numbers = #tpu.dot_dimension_numbers<[1], [0], [0], [1], [0, 0, 1, 1], [], []>} : vector<2x32xf32>, vector<32x32xf32>, vector<2x32xf32> -> vector<2x32xf32>
    %c0_3 = arith.constant 0 : index
    %c0_4 = arith.constant 0 : index
    %3 = vector.load %arg3[%c0_3, %c0_4] : memref<1x32xf32, #tpu.memory_space<vmem>>, vector<1x32xf32>
    %4 = vector.broadcast %3 : vector<1x32xf32> to vector<2x32xf32>
    %5 = arith.addf %2, %4 : vector<2x32xf32>
    %6 = math.tanh %5 : vector<2x32xf32>
    %c0_5 = arith.constant 0 : index
    %c0_6 = arith.constant 0 : index
    %7 = vector.load %arg4[%c0_5, %c0_6] : memref<32x128xf32, #tpu.memory_space<vmem>>, vector<32x128xf32>
    %cst_7 = arith.constant dense<0.000000e+00> : vector<2x128xf32>
    %8 = tpu.matmul %6, %7, %cst_7 {dimension_numbers = #tpu.dot_dimension_numbers<[1], [0], [0], [1], [0, 0, 1, 1], [], []>} : vector<2x32xf32>, vector<32x128xf32>, vector<2x128xf32> -> vector<2x128xf32>
    %c0_8 = arith.constant 0 : index
    %c0_9 = arith.constant 0 : index
    %9 = vector.load %arg5[%c0_8, %c0_9] : memref<1x128xf32, #tpu.memory_space<vmem>>, vector<1x128xf32>
    %10 = vector.broadcast %9 : vector<1x128xf32> to vector<2x128xf32>
    %11 = arith.addf %8, %10 : vector<2x128xf32>
    %c0_10 = arith.constant 0 : index
    %c0_11 = arith.constant 0 : index
    %12 = vector.load %arg6[%c0_10, %c0_11] : memref<2x128xf32, #tpu.memory_space<vmem>>, vector<2x128xf32>
    tpu.vector_store %arg6[%c0_10, %c0_11], %11 {strides = array<i32>} : memref<2x128xf32, #tpu.memory_space<vmem>>, vector<2x128xf32>,
    return
  }
  func.func @transform_0(%arg0: i32) -> (i32, i32) {
    %c0_i32 = arith.constant 0 : i32
    %c0_i32_0 = arith.constant 0 : i32
    %c0_i32_1 = arith.constant 0 : i32
    return %c0_i32, %c0_i32_0 : i32, i32
  }
  func.func @transform_1(%arg0: i32) -> (i32, i32) {
    %c0_i32 = arith.constant 0 : i32
    %c0_i32_0 = arith.constant 0 : i32
    %c0_i32_1 = arith.constant 0 : i32
    return %c0_i32, %c0_i32_0 : i32, i32
  }
  func.func @transform_2(%arg0: i32) -> (i32, i32) {
    %c0_i32 = arith.constant 0 : i32
    %c0_i32_0 = arith.constant 0 : i32
    %c0_i32_1 = arith.constant 0 : i32
    return %c0_i32, %c0_i32_0 : i32, i32
  }
  func.func @transform_3(%arg0: i32) -> (i32, i32) {
    %c0_i32 = arith.constant 0 : i32
    %c0_i32_0 = arith.constant 0 : i32
    %c0_i32_1 = arith.constant 0 : i32
    return %c0_i32, %c0_i32_0 : i32, i32
  }
  func.func @transform_4(%arg0: i32) -> (i32, i32) {
    %c0_i32 = arith.constant 0 : i32
    %c0_i32_0 = arith.constant 0 : i32
    %c0_i32_1 = arith.constant 0 : i32
    return %c0_i32, %c0_i32_0 : i32, i32
  }
  func.func @transform_5(%arg0: i32) -> (i32, i32) {
    %c0_i32 = arith.constant 0 : i32
    %c0_i32_0 = arith.constant 0 : i32
    %c0_i32_1 = arith.constant 0 : i32
    return %c0_i32, %c0_i32_0 : i32, i32
  }
}

module attributes {stable_mosaic.version = 11 : i64} {
  func.func @_encoder_kernel(%arg0: i32, %arg1: memref<16x32xf32, #tpu.memory_space<vmem>>, %arg2: memref<2x1x8xf32, #tpu.memory_space<vmem>>, %arg3: memref<1x32xf32, #tpu.memory_space<vmem>>, %arg4: memref<1x32xf32, #tpu.memory_space<vmem>>, %arg5: memref<1x32x96xf32, #tpu.memory_space<vmem>>, %arg6: memref<1x1x96xf32, #tpu.memory_space<vmem>>, %arg7: memref<1x32x32xf32, #tpu.memory_space<vmem>>, %arg8: memref<1x1x32xf32, #tpu.memory_space<vmem>>, %arg9: memref<1x1x32xf32, #tpu.memory_space<vmem>>, %arg10: memref<1x1x32xf32, #tpu.memory_space<vmem>>, %arg11: memref<1x32x64xf32, #tpu.memory_space<vmem>>, %arg12: memref<1x1x64xf32, #tpu.memory_space<vmem>>, %arg13: memref<1x64x32xf32, #tpu.memory_space<vmem>>, %arg14: memref<1x1x32xf32, #tpu.memory_space<vmem>>, %arg15: memref<1x1x32xf32, #tpu.memory_space<vmem>>, %arg16: memref<1x1x32xf32, #tpu.memory_space<vmem>>, %arg17: memref<16x32xf32, #tpu.memory_space<vmem>>) attributes {dimension_semantics = [#tpu.dimension_semantics<arbitrary>], iteration_bounds = array<i64: 2>, scalar_prefetch = 0 : i64, scratch_operands = 0 : i64, tpu.core_type = #tpu.core_type<tc>, window_params = [{pipeline_mode = #tpu.pipeline_mode<synchronous>, transform_indices = @transform_0, window_bounds = array<i64: 16, 32>}, {pipeline_mode = #tpu.pipeline_mode<synchronous>, transform_indices = @transform_1, window_bounds = array<i64: 2, 1, 8>}, {pipeline_mode = #tpu.pipeline_mode<synchronous>, transform_indices = @transform_2, window_bounds = array<i64: 1, 32>}, {pipeline_mode = #tpu.pipeline_mode<synchronous>, transform_indices = @transform_3, window_bounds = array<i64: 1, 32>}, {transform_indices = @transform_4, window_bounds = array<i64: 1, 32, 96>}, {transform_indices = @transform_5, window_bounds = array<i64: 1, 1, 96>}, {transform_indices = @transform_6, window_bounds = array<i64: 1, 32, 32>}, {transform_indices = @transform_7, window_bounds = array<i64: 1, 1, 32>}, {transform_indices = @transform_8, window_bounds = array<i64: 1, 1, 32>}, {transform_indices = @transform_9, window_bounds = array<i64: 1, 1, 32>}, {transform_indices = @transform_10, window_bounds = array<i64: 1, 32, 64>}, {transform_indices = @transform_11, window_bounds = array<i64: 1, 1, 64>}, {transform_indices = @transform_12, window_bounds = array<i64: 1, 64, 32>}, {transform_indices = @transform_13, window_bounds = array<i64: 1, 1, 32>}, {transform_indices = @transform_14, window_bounds = array<i64: 1, 1, 32>}, {transform_indices = @transform_15, window_bounds = array<i64: 1, 1, 32>}, {pipeline_mode = #tpu.pipeline_mode<synchronous>, transform_indices = @transform_16, window_bounds = array<i64: 16, 32>}]} {
    %c0_i32 = arith.constant 0 : i32
    %0 = arith.cmpi eq, %arg0, %c0_i32 : i32
    %1 = arith.extui %0 : i1 to i32
    %c0_i32_0 = arith.constant 0 : i32
    %2 = arith.cmpi ne, %1, %c0_i32_0 : i32
    scf.if %2 {
      %c0_86 = arith.constant 0 : index
      %c0_87 = arith.constant 0 : index
      %181 = vector.load %arg1[%c0_86, %c0_87] : memref<16x32xf32, #tpu.memory_space<vmem>>, vector<16x32xf32>
      %c0_88 = arith.constant 0 : index
      %c0_89 = arith.constant 0 : index
      %182 = vector.load %arg3[%c0_88, %c0_89] : memref<1x32xf32, #tpu.memory_space<vmem>>, vector<1x32xf32>
      %c0_90 = arith.constant 0 : index
      %c0_91 = arith.constant 0 : index
      %183 = vector.load %arg4[%c0_90, %c0_91] : memref<1x32xf32, #tpu.memory_space<vmem>>, vector<1x32xf32>
      %cst_92 = arith.constant dense<0.000000e+00> : vector<16xf32>
      %184 = vector.multi_reduction <add>, %181, %cst_92 [1] : vector<16x32xf32> to vector<16xf32>
      %185 = vector.shape_cast %184 : vector<16xf32> to vector<16x1xf32>
      %cst_93 = arith.constant 3.200000e+01 : f32
      %186 = vector.broadcast %cst_93 : f32 to vector<16x1xf32>
      %187 = arith.divf %185, %186 : vector<16x1xf32>
      %188 = vector.broadcast %187 : vector<16x1xf32> to vector<16x32xf32>
      %189 = arith.subf %181, %188 : vector<16x32xf32>
      %190 = arith.mulf %189, %189 : vector<16x32xf32>
      %cst_94 = arith.constant dense<0.000000e+00> : vector<16xf32>
      %191 = vector.multi_reduction <add>, %190, %cst_94 [1] : vector<16x32xf32> to vector<16xf32>
      %192 = vector.shape_cast %191 : vector<16xf32> to vector<16x1xf32>
      %cst_95 = arith.constant 3.200000e+01 : f32
      %193 = vector.broadcast %cst_95 : f32 to vector<16x1xf32>
      %194 = arith.divf %192, %193 : vector<16x1xf32>
      %195 = vector.broadcast %187 : vector<16x1xf32> to vector<16x32xf32>
      %196 = arith.subf %181, %195 : vector<16x32xf32>
      %cst_96 = arith.constant 9.99999996E-13 : f32
      %197 = vector.broadcast %cst_96 : f32 to vector<16x1xf32>
      %198 = arith.addf %194, %197 : vector<16x1xf32>
      %199 = math.rsqrt %198 : vector<16x1xf32>
      %200 = vector.broadcast %199 : vector<16x1xf32> to vector<16x32xf32>
      %201 = arith.mulf %196, %200 : vector<16x32xf32>
      %202 = vector.broadcast %182 : vector<1x32xf32> to vector<16x32xf32>
      %203 = arith.mulf %201, %202 : vector<16x32xf32>
      %204 = vector.broadcast %183 : vector<1x32xf32> to vector<16x32xf32>
      %205 = arith.addf %203, %204 : vector<16x32xf32>
      %c0_97 = arith.constant 0 : index
      %c0_98 = arith.constant 0 : index
      %206 = vector.load %arg17[%c0_97, %c0_98] : memref<16x32xf32, #tpu.memory_space<vmem>>, vector<16x32xf32>
      tpu.vector_store %arg17[%c0_97, %c0_98], %205 {strides = array<i32>} : memref<16x32xf32, #tpu.memory_space<vmem>>, vector<16x32xf32>,
    } else {
    }
    %c0 = arith.constant 0 : index
    %c0_1 = arith.constant 0 : index
    %3 = vector.load %arg17[%c0, %c0_1] : memref<16x32xf32, #tpu.memory_space<vmem>>, vector<16x32xf32>
    %c0_2 = arith.constant 0 : index
    %c0_3 = arith.constant 0 : index
    %c0_4 = arith.constant 0 : index
    %4 = vector.load %arg5[%c0_2, %c0_3, %c0_4] : memref<1x32x96xf32, #tpu.memory_space<vmem>>, vector<1x32x96xf32>
    %5 = vector.shape_cast %4 : vector<1x32x96xf32> to vector<32x96xf32>
    %cst = arith.constant dense<0.000000e+00> : vector<16x96xf32>
    %6 = tpu.matmul %3, %5, %cst {dimension_numbers = #tpu.dot_dimension_numbers<[1], [0], [0], [1], [0, 0, 1, 1], [], []>} : vector<16x32xf32>, vector<32x96xf32>, vector<16x96xf32> -> vector<16x96xf32>
    %c0_5 = arith.constant 0 : index
    %c0_6 = arith.constant 0 : index
    %c0_7 = arith.constant 0 : index
    %7 = vector.load %arg6[%c0_5, %c0_6, %c0_7] : memref<1x1x96xf32, #tpu.memory_space<vmem>>, vector<1x1x96xf32>
    %8 = vector.shape_cast %7 : vector<1x1x96xf32> to vector<1x96xf32>
    %9 = vector.broadcast %8 : vector<1x96xf32> to vector<16x96xf32>
    %10 = arith.addf %6, %9 : vector<16x96xf32>
    %c0_8 = arith.constant 0 : index
    %c0_9 = arith.constant 0 : index
    %c0_10 = arith.constant 0 : index
    %11 = vector.load %arg2[%c0_8, %c0_9, %c0_10] : memref<2x1x8xf32, #tpu.memory_space<vmem>>, vector<2x1x8xf32>
    %c0_11 = arith.constant 0 : index
    %c0_12 = arith.constant 0 : index
    %c0_13 = arith.constant 0 : index
    %12 = vector.load %arg8[%c0_11, %c0_12, %c0_13] : memref<1x1x32xf32, #tpu.memory_space<vmem>>, vector<1x1x32xf32>
    %13 = vector.shape_cast %12 : vector<1x1x32xf32> to vector<1x32xf32>
    %14 = vector.extract_strided_slice %10 {offsets = [0, 0], sizes = [16, 16], strides = [1, 1]} : vector<16x96xf32> to vector<16x16xf32>
    %15 = vector.shape_cast %14 : vector<16x16xf32> to vector<2x8x16xf32>
    %16 = vector.extract_strided_slice %10 {offsets = [0, 32], sizes = [16, 16], strides = [1, 1]} : vector<16x96xf32> to vector<16x16xf32>
    %17 = vector.shape_cast %16 : vector<16x16xf32> to vector<2x8x16xf32>
    %18 = vector.extract_strided_slice %10 {offsets = [0, 64], sizes = [16, 16], strides = [1, 1]} : vector<16x96xf32> to vector<16x16xf32>
    %19 = vector.shape_cast %18 : vector<16x16xf32> to vector<2x8x16xf32>
    "tpu.trace_start"() <{level = 10 : i32, message = "bqd,bkd->bqk"}> : () -> ()
    %cst_14 = arith.constant dense<0.000000e+00> : vector<2x8x8xf32>
    %20 = tpu.matmul %15, %17, %cst_14 {dimension_numbers = #tpu.dot_dimension_numbers<[2], [2], [1], [1], [0, 0, 0, 1, 1, 1], [0], [0]>} : vector<2x8x16xf32>, vector<2x8x16xf32>, vector<2x8x8xf32> -> vector<2x8x8xf32>
    "tpu.trace_stop"() : () -> ()
    %cst_15 = arith.constant 2.500000e-01 : f32
    %21 = vector.broadcast %cst_15 : f32 to vector<2x8x8xf32>
    %22 = arith.mulf %20, %21 : vector<2x8x8xf32>
    %23 = vector.broadcast %11 : vector<2x1x8xf32> to vector<2x8x8xf32>
    %24 = arith.addf %22, %23 : vector<2x8x8xf32>
    %cst_16 = arith.constant dense<0xFF800000> : vector<2x8xf32>
    %25 = vector.multi_reduction <maximumf>, %24, %cst_16 [2] : vector<2x8x8xf32> to vector<2x8xf32>
    %26 = vector.shape_cast %25 : vector<2x8xf32> to vector<2x8x1xf32>
    %27 = vector.broadcast %26 : vector<2x8x1xf32> to vector<2x8x8xf32>
    %28 = arith.subf %24, %27 : vector<2x8x8xf32>
    %29 = math.exp %28 : vector<2x8x8xf32>
    %cst_17 = arith.constant dense<0.000000e+00> : vector<2x8xf32>
    %30 = vector.multi_reduction <add>, %29, %cst_17 [2] : vector<2x8x8xf32> to vector<2x8xf32>
    %31 = vector.shape_cast %30 : vector<2x8xf32> to vector<2x8x1xf32>
    %32 = tpu.reciprocal %31 {approx = true} : vector<2x8x1xf32> -> vector<2x8x1xf32>
    %33 = vector.broadcast %32 : vector<2x8x1xf32> to vector<2x8x8xf32>
    %34 = arith.mulf %29, %33 : vector<2x8x8xf32>
    "tpu.trace_start"() <{level = 10 : i32, message = "bqk,bkd->bqd"}> : () -> ()
    %cst_18 = arith.constant dense<0.000000e+00> : vector<2x8x16xf32>
    %35 = tpu.matmul %34, %19, %cst_18 {dimension_numbers = #tpu.dot_dimension_numbers<[2], [1], [1], [2], [0, 0, 0, 1, 1, 2], [0], [0]>} : vector<2x8x8xf32>, vector<2x8x16xf32>, vector<2x8x16xf32> -> vector<2x8x16xf32>
    "tpu.trace_stop"() : () -> ()
    %36 = vector.shape_cast %35 : vector<2x8x16xf32> to vector<16x16xf32>
    %c0_19 = arith.constant 0 : index
    %c0_20 = arith.constant 0 : index
    %c0_21 = arith.constant 0 : index
    %37 = vector.load %arg7[%c0_19, %c0_20, %c0_21] : memref<1x32x32xf32, #tpu.memory_space<vmem>>, vector<1x32x32xf32>
    %38 = vector.shape_cast %37 : vector<1x32x32xf32> to vector<32x32xf32>
    %39 = vector.extract_strided_slice %38 {offsets = [0, 0], sizes = [16, 32], strides = [1, 1]} : vector<32x32xf32> to vector<16x32xf32>
    %cst_22 = arith.constant dense<0.000000e+00> : vector<16x32xf32>
    %40 = tpu.matmul %36, %39, %cst_22 {dimension_numbers = #tpu.dot_dimension_numbers<[1], [0], [0], [1], [0, 0, 1, 1], [], []>} : vector<16x16xf32>, vector<16x32xf32>, vector<16x32xf32> -> vector<16x32xf32>
    %41 = vector.broadcast %13 : vector<1x32xf32> to vector<16x32xf32>
    %42 = arith.addf %41, %40 : vector<16x32xf32>
    %43 = vector.extract_strided_slice %10 {offsets = [0, 16], sizes = [16, 16], strides = [1, 1]} : vector<16x96xf32> to vector<16x16xf32>
    %44 = vector.shape_cast %43 : vector<16x16xf32> to vector<2x8x16xf32>
    %45 = vector.extract_strided_slice %10 {offsets = [0, 48], sizes = [16, 16], strides = [1, 1]} : vector<16x96xf32> to vector<16x16xf32>
    %46 = vector.shape_cast %45 : vector<16x16xf32> to vector<2x8x16xf32>
    %47 = vector.extract_strided_slice %10 {offsets = [0, 80], sizes = [16, 16], strides = [1, 1]} : vector<16x96xf32> to vector<16x16xf32>
    %48 = vector.shape_cast %47 : vector<16x16xf32> to vector<2x8x16xf32>
    "tpu.trace_start"() <{level = 10 : i32, message = "bqd,bkd->bqk"}> : () -> ()
    %cst_23 = arith.constant dense<0.000000e+00> : vector<2x8x8xf32>
    %49 = tpu.matmul %44, %46, %cst_23 {dimension_numbers = #tpu.dot_dimension_numbers<[2], [2], [1], [1], [0, 0, 0, 1, 1, 1], [0], [0]>} : vector<2x8x16xf32>, vector<2x8x16xf32>, vector<2x8x8xf32> -> vector<2x8x8xf32>
    "tpu.trace_stop"() : () -> ()
    %cst_24 = arith.constant 2.500000e-01 : f32
    %50 = vector.broadcast %cst_24 : f32 to vector<2x8x8xf32>
    %51 = arith.mulf %49, %50 : vector<2x8x8xf32>
    %52 = vector.broadcast %11 : vector<2x1x8xf32> to vector<2x8x8xf32>
    %53 = arith.addf %51, %52 : vector<2x8x8xf32>
    %cst_25 = arith.constant dense<0xFF800000> : vector<2x8xf32>
    %54 = vector.multi_reduction <maximumf>, %53, %cst_25 [2] : vector<2x8x8xf32> to vector<2x8xf32>
    %55 = vector.shape_cast %54 : vector<2x8xf32> to vector<2x8x1xf32>
    %56 = vector.broadcast %55 : vector<2x8x1xf32> to vector<2x8x8xf32>
    %57 = arith.subf %53, %56 : vector<2x8x8xf32>
    %58 = math.exp %57 : vector<2x8x8xf32>
    %cst_26 = arith.constant dense<0.000000e+00> : vector<2x8xf32>
    %59 = vector.multi_reduction <add>, %58, %cst_26 [2] : vector<2x8x8xf32> to vector<2x8xf32>
    %60 = vector.shape_cast %59 : vector<2x8xf32> to vector<2x8x1xf32>
    %61 = tpu.reciprocal %60 {approx = true} : vector<2x8x1xf32> -> vector<2x8x1xf32>
    %62 = vector.broadcast %61 : vector<2x8x1xf32> to vector<2x8x8xf32>
    %63 = arith.mulf %58, %62 : vector<2x8x8xf32>
    "tpu.trace_start"() <{level = 10 : i32, message = "bqk,bkd->bqd"}> : () -> ()
    %cst_27 = arith.constant dense<0.000000e+00> : vector<2x8x16xf32>
    %64 = tpu.matmul %63, %48, %cst_27 {dimension_numbers = #tpu.dot_dimension_numbers<[2], [1], [1], [2], [0, 0, 0, 1, 1, 2], [0], [0]>} : vector<2x8x8xf32>, vector<2x8x16xf32>, vector<2x8x16xf32> -> vector<2x8x16xf32>
    "tpu.trace_stop"() : () -> ()
    %65 = vector.shape_cast %64 : vector<2x8x16xf32> to vector<16x16xf32>
    %c0_28 = arith.constant 0 : index
    %c0_29 = arith.constant 0 : index
    %c0_30 = arith.constant 0 : index
    %66 = vector.load %arg7[%c0_28, %c0_29, %c0_30] : memref<1x32x32xf32, #tpu.memory_space<vmem>>, vector<1x32x32xf32>
    %67 = vector.shape_cast %66 : vector<1x32x32xf32> to vector<32x32xf32>
    %68 = vector.extract_strided_slice %67 {offsets = [16, 0], sizes = [16, 32], strides = [1, 1]} : vector<32x32xf32> to vector<16x32xf32>
    %cst_31 = arith.constant dense<0.000000e+00> : vector<16x32xf32>
    %69 = tpu.matmul %65, %68, %cst_31 {dimension_numbers = #tpu.dot_dimension_numbers<[1], [0], [0], [1], [0, 0, 1, 1], [], []>} : vector<16x16xf32>, vector<16x32xf32>, vector<16x32xf32> -> vector<16x32xf32>
    %70 = arith.addf %42, %69 : vector<16x32xf32>
    %71 = arith.addf %3, %70 : vector<16x32xf32>
    %c0_32 = arith.constant 0 : index
    %c0_33 = arith.constant 0 : index
    %c0_34 = arith.constant 0 : index
    %72 = vector.load %arg9[%c0_32, %c0_33, %c0_34] : memref<1x1x32xf32, #tpu.memory_space<vmem>>, vector<1x1x32xf32>
    %73 = vector.shape_cast %72 : vector<1x1x32xf32> to vector<1x32xf32>
    %c0_35 = arith.constant 0 : index
    %c0_36 = arith.constant 0 : index
    %c0_37 = arith.constant 0 : index
    %74 = vector.load %arg10[%c0_35, %c0_36, %c0_37] : memref<1x1x32xf32, #tpu.memory_space<vmem>>, vector<1x1x32xf32>
    %75 = vector.shape_cast %74 : vector<1x1x32xf32> to vector<1x32xf32>
    %cst_38 = arith.constant dense<0.000000e+00> : vector<16xf32>
    %76 = vector.multi_reduction <add>, %71, %cst_38 [1] : vector<16x32xf32> to vector<16xf32>
    %77 = vector.shape_cast %76 : vector<16xf32> to vector<16x1xf32>
    %cst_39 = arith.constant 3.200000e+01 : f32
    %78 = vector.broadcast %cst_39 : f32 to vector<16x1xf32>
    %79 = arith.divf %77, %78 : vector<16x1xf32>
    %80 = vector.broadcast %79 : vector<16x1xf32> to vector<16x32xf32>
    %81 = arith.subf %71, %80 : vector<16x32xf32>
    %82 = arith.mulf %81, %81 : vector<16x32xf32>
    %cst_40 = arith.constant dense<0.000000e+00> : vector<16xf32>
    %83 = vector.multi_reduction <add>, %82, %cst_40 [1] : vector<16x32xf32> to vector<16xf32>
    %84 = vector.shape_cast %83 : vector<16xf32> to vector<16x1xf32>
    %cst_41 = arith.constant 3.200000e+01 : f32
    %85 = vector.broadcast %cst_41 : f32 to vector<16x1xf32>
    %86 = arith.divf %84, %85 : vector<16x1xf32>
    %87 = vector.broadcast %79 : vector<16x1xf32> to vector<16x32xf32>
    %88 = arith.subf %71, %87 : vector<16x32xf32>
    %cst_42 = arith.constant 9.99999996E-13 : f32
    %89 = vector.broadcast %cst_42 : f32 to vector<16x1xf32>
    %90 = arith.addf %86, %89 : vector<16x1xf32>
    %91 = math.rsqrt %90 : vector<16x1xf32>
    %92 = vector.broadcast %91 : vector<16x1xf32> to vector<16x32xf32>
    %93 = arith.mulf %88, %92 : vector<16x32xf32>
    %94 = vector.broadcast %73 : vector<1x32xf32> to vector<16x32xf32>
    %95 = arith.mulf %93, %94 : vector<16x32xf32>
    %96 = vector.broadcast %75 : vector<1x32xf32> to vector<16x32xf32>
    %97 = arith.addf %95, %96 : vector<16x32xf32>
    %c0_43 = arith.constant 0 : index
    %c0_44 = arith.constant 0 : index
    %c0_45 = arith.constant 0 : index
    %98 = vector.load %arg11[%c0_43, %c0_44, %c0_45] : memref<1x32x64xf32, #tpu.memory_space<vmem>>, vector<1x32x64xf32>
    %99 = vector.shape_cast %98 : vector<1x32x64xf32> to vector<32x64xf32>
    %cst_46 = arith.constant dense<0.000000e+00> : vector<16x64xf32>
    %100 = tpu.matmul %97, %99, %cst_46 {dimension_numbers = #tpu.dot_dimension_numbers<[1], [0], [0], [1], [0, 0, 1, 1], [], []>} : vector<16x32xf32>, vector<32x64xf32>, vector<16x64xf32> -> vector<16x64xf32>
    %c0_47 = arith.constant 0 : index
    %c0_48 = arith.constant 0 : index
    %c0_49 = arith.constant 0 : index
    %101 = vector.load %arg12[%c0_47, %c0_48, %c0_49] : memref<1x1x64xf32, #tpu.memory_space<vmem>>, vector<1x1x64xf32>
    %102 = vector.shape_cast %101 : vector<1x1x64xf32> to vector<1x64xf32>
    %103 = vector.broadcast %102 : vector<1x64xf32> to vector<16x64xf32>
    %104 = arith.addf %100, %103 : vector<16x64xf32>
    %cst_50 = arith.constant 5.000000e-01 : f32
    %105 = vector.broadcast %cst_50 : f32 to vector<16x64xf32>
    %106 = arith.mulf %105, %104 : vector<16x64xf32>
    %cst_51 = arith.constant 0.707106769 : f32
    %107 = vector.broadcast %cst_51 : f32 to vector<16x64xf32>
    %108 = arith.mulf %104, %107 : vector<16x64xf32>
    %cst_52 = arith.constant 0.000000e+00 : f32
    %109 = vector.broadcast %cst_52 : f32 to vector<16x64xf32>
    %110 = arith.cmpf oge, %108, %109 : vector<16x64xf32>
    %cst_53 = arith.constant 1.000000e+00 : f32
    %cst_54 = arith.constant -1.000000e+00 : f32
    %111 = vector.broadcast %cst_53 : f32 to vector<16x64xf32>
    %112 = vector.broadcast %cst_54 : f32 to vector<16x64xf32>
    %113 = arith.select %110, %111, %112 : vector<16x64xi1>, vector<16x64xf32>
    %114 = math.absf %108 : vector<16x64xf32>
    %cst_55 = arith.constant 0.327591091 : f32
    %115 = vector.broadcast %cst_55 : f32 to vector<16x64xf32>
    %116 = arith.mulf %115, %114 : vector<16x64xf32>
    %cst_56 = arith.constant 1.000000e+00 : f32
    %117 = vector.broadcast %cst_56 : f32 to vector<16x64xf32>
    %118 = arith.addf %117, %116 : vector<16x64xf32>
    %cst_57 = arith.constant 1.000000e+00 : f32
    %119 = vector.broadcast %cst_57 : f32 to vector<16x64xf32>
    %120 = arith.divf %119, %118 : vector<16x64xf32>
    %cst_58 = arith.constant 1.06140542 : f32
    %121 = vector.broadcast %cst_58 : f32 to vector<16x64xf32>
    %122 = arith.mulf %121, %120 : vector<16x64xf32>
    %cst_59 = arith.constant -1.45315206 : f32
    %123 = vector.broadcast %cst_59 : f32 to vector<16x64xf32>
    %124 = arith.addf %122, %123 : vector<16x64xf32>
    %125 = arith.mulf %124, %120 : vector<16x64xf32>
    %cst_60 = arith.constant 1.42141378 : f32
    %126 = vector.broadcast %cst_60 : f32 to vector<16x64xf32>
    %127 = arith.addf %125, %126 : vector<16x64xf32>
    %128 = arith.mulf %127, %120 : vector<16x64xf32>
    %cst_61 = arith.constant -0.284496725 : f32
    %129 = vector.broadcast %cst_61 : f32 to vector<16x64xf32>
    %130 = arith.addf %128, %129 : vector<16x64xf32>
    %131 = arith.mulf %130, %120 : vector<16x64xf32>
    %cst_62 = arith.constant 0.254829586 : f32
    %132 = vector.broadcast %cst_62 : f32 to vector<16x64xf32>
    %133 = arith.addf %131, %132 : vector<16x64xf32>
    %134 = arith.mulf %133, %120 : vector<16x64xf32>
    %cst_63 = arith.constant 0.000000e+00 : f32
    %135 = vector.broadcast %cst_63 : f32 to vector<16x64xf32>
    %136 = arith.subf %135, %114 : vector<16x64xf32>
    %137 = arith.mulf %136, %114 : vector<16x64xf32>
    %138 = math.exp %137 : vector<16x64xf32>
    %139 = arith.mulf %134, %138 : vector<16x64xf32>
    %cst_64 = arith.constant 1.000000e+00 : f32
    %140 = vector.broadcast %cst_64 : f32 to vector<16x64xf32>
    %141 = arith.subf %140, %139 : vector<16x64xf32>
    %142 = arith.mulf %113, %141 : vector<16x64xf32>
    %cst_65 = arith.constant 1.000000e+00 : f32
    %143 = vector.broadcast %cst_65 : f32 to vector<16x64xf32>
    %144 = arith.addf %143, %142 : vector<16x64xf32>
    %145 = arith.mulf %106, %144 : vector<16x64xf32>
    %c0_66 = arith.constant 0 : index
    %c0_67 = arith.constant 0 : index
    %c0_68 = arith.constant 0 : index
    %146 = vector.load %arg13[%c0_66, %c0_67, %c0_68] : memref<1x64x32xf32, #tpu.memory_space<vmem>>, vector<1x64x32xf32>
    %147 = vector.shape_cast %146 : vector<1x64x32xf32> to vector<64x32xf32>
    %cst_69 = arith.constant dense<0.000000e+00> : vector<16x32xf32>
    %148 = tpu.matmul %145, %147, %cst_69 {dimension_numbers = #tpu.dot_dimension_numbers<[1], [0], [0], [1], [0, 0, 1, 1], [], []>} : vector<16x64xf32>, vector<64x32xf32>, vector<16x32xf32> -> vector<16x32xf32>
    %c0_70 = arith.constant 0 : index
    %c0_71 = arith.constant 0 : index
    %c0_72 = arith.constant 0 : index
    %149 = vector.load %arg14[%c0_70, %c0_71, %c0_72] : memref<1x1x32xf32, #tpu.memory_space<vmem>>, vector<1x1x32xf32>
    %150 = vector.shape_cast %149 : vector<1x1x32xf32> to vector<1x32xf32>
    %151 = vector.broadcast %150 : vector<1x32xf32> to vector<16x32xf32>
    %152 = arith.addf %148, %151 : vector<16x32xf32>
    %153 = arith.addf %97, %152 : vector<16x32xf32>
    %c0_73 = arith.constant 0 : index
    %c0_74 = arith.constant 0 : index
    %c0_75 = arith.constant 0 : index
    %154 = vector.load %arg15[%c0_73, %c0_74, %c0_75] : memref<1x1x32xf32, #tpu.memory_space<vmem>>, vector<1x1x32xf32>
    %155 = vector.shape_cast %154 : vector<1x1x32xf32> to vector<1x32xf32>
    %c0_76 = arith.constant 0 : index
    %c0_77 = arith.constant 0 : index
    %c0_78 = arith.constant 0 : index
    %156 = vector.load %arg16[%c0_76, %c0_77, %c0_78] : memref<1x1x32xf32, #tpu.memory_space<vmem>>, vector<1x1x32xf32>
    %157 = vector.shape_cast %156 : vector<1x1x32xf32> to vector<1x32xf32>
    %cst_79 = arith.constant dense<0.000000e+00> : vector<16xf32>
    %158 = vector.multi_reduction <add>, %153, %cst_79 [1] : vector<16x32xf32> to vector<16xf32>
    %159 = vector.shape_cast %158 : vector<16xf32> to vector<16x1xf32>
    %cst_80 = arith.constant 3.200000e+01 : f32
    %160 = vector.broadcast %cst_80 : f32 to vector<16x1xf32>
    %161 = arith.divf %159, %160 : vector<16x1xf32>
    %162 = vector.broadcast %161 : vector<16x1xf32> to vector<16x32xf32>
    %163 = arith.subf %153, %162 : vector<16x32xf32>
    %164 = arith.mulf %163, %163 : vector<16x32xf32>
    %cst_81 = arith.constant dense<0.000000e+00> : vector<16xf32>
    %165 = vector.multi_reduction <add>, %164, %cst_81 [1] : vector<16x32xf32> to vector<16xf32>
    %166 = vector.shape_cast %165 : vector<16xf32> to vector<16x1xf32>
    %cst_82 = arith.constant 3.200000e+01 : f32
    %167 = vector.broadcast %cst_82 : f32 to vector<16x1xf32>
    %168 = arith.divf %166, %167 : vector<16x1xf32>
    %169 = vector.broadcast %161 : vector<16x1xf32> to vector<16x32xf32>
    %170 = arith.subf %153, %169 : vector<16x32xf32>
    %cst_83 = arith.constant 9.99999996E-13 : f32
    %171 = vector.broadcast %cst_83 : f32 to vector<16x1xf32>
    %172 = arith.addf %168, %171 : vector<16x1xf32>
    %173 = math.rsqrt %172 : vector<16x1xf32>
    %174 = vector.broadcast %173 : vector<16x1xf32> to vector<16x32xf32>
    %175 = arith.mulf %170, %174 : vector<16x32xf32>
    %176 = vector.broadcast %155 : vector<1x32xf32> to vector<16x32xf32>
    %177 = arith.mulf %175, %176 : vector<16x32xf32>
    %178 = vector.broadcast %157 : vector<1x32xf32> to vector<16x32xf32>
    %179 = arith.addf %177, %178 : vector<16x32xf32>
    %c0_84 = arith.constant 0 : index
    %c0_85 = arith.constant 0 : index
    %180 = vector.load %arg17[%c0_84, %c0_85] : memref<16x32xf32, #tpu.memory_space<vmem>>, vector<16x32xf32>
    tpu.vector_store %arg17[%c0_84, %c0_85], %179 {strides = array<i32>} : memref<16x32xf32, #tpu.memory_space<vmem>>, vector<16x32xf32>,
    return
  }
  func.func @transform_0(%arg0: i32) -> (i32, i32) {
    %c0_i32 = arith.constant 0 : i32
    %c0_i32_0 = arith.constant 0 : i32
    %c0_i32_1 = arith.constant 0 : i32
    return %c0_i32, %c0_i32_0 : i32, i32
  }
  func.func @transform_1(%arg0: i32) -> (i32, i32, i32) {
    %c0_i32 = arith.constant 0 : i32
    %c0_i32_0 = arith.constant 0 : i32
    %c0_i32_1 = arith.constant 0 : i32
    %c0_i32_2 = arith.constant 0 : i32
    return %c0_i32, %c0_i32_0, %c0_i32_1 : i32, i32, i32
  }
  func.func @transform_2(%arg0: i32) -> (i32, i32) {
    %c0_i32 = arith.constant 0 : i32
    %c0_i32_0 = arith.constant 0 : i32
    %c0_i32_1 = arith.constant 0 : i32
    return %c0_i32, %c0_i32_0 : i32, i32
  }
  func.func @transform_3(%arg0: i32) -> (i32, i32) {
    %c0_i32 = arith.constant 0 : i32
    %c0_i32_0 = arith.constant 0 : i32
    %c0_i32_1 = arith.constant 0 : i32
    return %c0_i32, %c0_i32_0 : i32, i32
  }
  func.func @transform_4(%arg0: i32) -> (i32, i32, i32) {
    %c0_i32 = arith.constant 0 : i32
    %c0_i32_0 = arith.constant 0 : i32
    %c0_i32_1 = arith.constant 0 : i32
    return %arg0, %c0_i32, %c0_i32_0 : i32, i32, i32
  }
  func.func @transform_5(%arg0: i32) -> (i32, i32, i32) {
    %c0_i32 = arith.constant 0 : i32
    %c0_i32_0 = arith.constant 0 : i32
    %c0_i32_1 = arith.constant 0 : i32
    return %arg0, %c0_i32, %c0_i32_0 : i32, i32, i32
  }
  func.func @transform_6(%arg0: i32) -> (i32, i32, i32) {
    %c0_i32 = arith.constant 0 : i32
    %c0_i32_0 = arith.constant 0 : i32
    %c0_i32_1 = arith.constant 0 : i32
    return %arg0, %c0_i32, %c0_i32_0 : i32, i32, i32
  }
  func.func @transform_7(%arg0: i32) -> (i32, i32, i32) {
    %c0_i32 = arith.constant 0 : i32
    %c0_i32_0 = arith.constant 0 : i32
    %c0_i32_1 = arith.constant 0 : i32
    return %arg0, %c0_i32, %c0_i32_0 : i32, i32, i32
  }
  func.func @transform_8(%arg0: i32) -> (i32, i32, i32) {
    %c0_i32 = arith.constant 0 : i32
    %c0_i32_0 = arith.constant 0 : i32
    %c0_i32_1 = arith.constant 0 : i32
    return %arg0, %c0_i32, %c0_i32_0 : i32, i32, i32
  }
  func.func @transform_9(%arg0: i32) -> (i32, i32, i32) {
    %c0_i32 = arith.constant 0 : i32
    %c0_i32_0 = arith.constant 0 : i32
    %c0_i32_1 = arith.constant 0 : i32
    return %arg0, %c0_i32, %c0_i32_0 : i32, i32, i32
  }
  func.func @transform_10(%arg0: i32) -> (i32, i32, i32) {
    %c0_i32 = arith.constant 0 : i32
    %c0_i32_0 = arith.constant 0 : i32
    %c0_i32_1 = arith.constant 0 : i32
    return %arg0, %c0_i32, %c0_i32_0 : i32, i32, i32
  }
  func.func @transform_11(%arg0: i32) -> (i32, i32, i32) {
    %c0_i32 = arith.constant 0 : i32
    %c0_i32_0 = arith.constant 0 : i32
    %c0_i32_1 = arith.constant 0 : i32
    return %arg0, %c0_i32, %c0_i32_0 : i32, i32, i32
  }
  func.func @transform_12(%arg0: i32) -> (i32, i32, i32) {
    %c0_i32 = arith.constant 0 : i32
    %c0_i32_0 = arith.constant 0 : i32
    %c0_i32_1 = arith.constant 0 : i32
    return %arg0, %c0_i32, %c0_i32_0 : i32, i32, i32
  }
  func.func @transform_13(%arg0: i32) -> (i32, i32, i32) {
    %c0_i32 = arith.constant 0 : i32
    %c0_i32_0 = arith.constant 0 : i32
    %c0_i32_1 = arith.constant 0 : i32
    return %arg0, %c0_i32, %c0_i32_0 : i32, i32, i32
  }
  func.func @transform_14(%arg0: i32) -> (i32, i32, i32) {
    %c0_i32 = arith.constant 0 : i32
    %c0_i32_0 = arith.constant 0 : i32
    %c0_i32_1 = arith.constant 0 : i32
    return %arg0, %c0_i32, %c0_i32_0 : i32, i32, i32
  }
  func.func @transform_15(%arg0: i32) -> (i32, i32, i32) {
    %c0_i32 = arith.constant 0 : i32
    %c0_i32_0 = arith.constant 0 : i32
    %c0_i32_1 = arith.constant 0 : i32
    return %arg0, %c0_i32, %c0_i32_0 : i32, i32, i32
  }
  func.func @transform_16(%arg0: i32) -> (i32, i32) {
    %c0_i32 = arith.constant 0 : i32
    %c0_i32_0 = arith.constant 0 : i32
    %c0_i32_1 = arith.constant 0 : i32
    return %c0_i32, %c0_i32_0 : i32, i32
  }
}

</mosaic_0001>

<llo_original>
// kernel: kcbert_forward.3
$region0: #{kcbert_forward.3}
  #allocation0 [shape = 'u32[]', space=smem, size = 0x4, offset = 0x4, fixed_abs, tag = 'smem constant byte address 0x4 - core index']
  #allocation1 [shape = 'u32[144,128]{1,0:T(1,128)}', space=vmem, size = 0x12000, scoped, tag = 'internal scratch']
  %s0 = inlined_call_operand.vmem [shape: f32[2,32], index: 0, kind: input, shape index: {}]
  %s1 = inlined_call_operand.vmem [shape: f32[32,32], index: 1, kind: input, shape index: {}]
  %s2 = inlined_call_operand.vmem [shape: f32[1,32], index: 2, kind: input, shape index: {}]
  %s3 = inlined_call_operand.vmem [shape: f32[32,128], index: 3, kind: input, shape index: {}]
  %s4 = inlined_call_operand.vmem [shape: f32[1,128], index: 4, kind: input, shape index: {}]
  %s5 = inlined_call_operand.hbm [shape: f32[2,128], index: 5, kind: output, shape index: {}]
  %s6 = sld [smem:[#allocation0]]
  $region30: #{kcbert_forward.3} parent=0
    _
  %s8 = ssub.s32 1, %s6
  %s9 = scalar_select 0, %s8, %s6
  $region1: #{kcbert_forward.3} parent=0
    #allocation2 [shape = 'u8[1024]{0}', space=vmem, size = 0x400, scoped, tag = 'output window, operand 0, single buffered']
    #allocation3 [shape = 's32[1]{0}', space=sflag, size = 0x4, scoped, tag = 'scoped memory for kcbert_forward.3']
    %10 = vsyncpa [#allocation3], 0
    // Predicated region
    $region2: #{kcbert_forward.3} parent=1 // pred_check
      _
    $region3: #{kcbert_forward.3} parent=1 // pred_check_branch
      %12 = sbr.rel (0) target = $region5
    $region4: #{kcbert_forward.3} parent=1 // pred_region
      _
    $region5: #{kcbert_forward.3} parent=1 // pred_fallthru
      _
    // Predicated region
    $region6: #{kcbert_forward.3} parent=1 // pred_check
      _
    $region7: #{kcbert_forward.3} parent=1 // pred_check_branch
      %14 = sbr.rel (0) target = $region9
    $region8: #{kcbert_forward.3} parent=1 // pred_region
      _
    $region9: #{kcbert_forward.3} parent=1 // pred_fallthru
      _
    // Predicated region
    $region10: #{kcbert_forward.3} parent=1 // pred_check
      _
    $region11: #{kcbert_forward.3} parent=1 // pred_check_branch
      %16 = sbr.rel (0) target = $region13
    $region12: #{kcbert_forward.3} parent=1 // pred_region
      _
    $region13: #{kcbert_forward.3} parent=1 // pred_fallthru
      _
    // Predicated region
    $region14: #{kcbert_forward.3} parent=1 // pred_check
      _
    $region15: #{kcbert_forward.3} parent=1 // pred_check_branch
      %18 = sbr.rel (0) target = $region17
    $region16: #{kcbert_forward.3} parent=1 // pred_region
      _
    $region17: #{kcbert_forward.3} parent=1 // pred_fallthru
      _
    // Predicated region
    $region18: #{kcbert_forward.3} parent=1 // pred_check
      _
    $region19: #{kcbert_forward.3} parent=1 // pred_check_branch
      %20 = sbr.rel (0) target = $region21
    $region20: #{kcbert_forward.3} parent=1 // pred_region
      _
    $region21: #{kcbert_forward.3} parent=1 // pred_fallthru
      _
    %v21 = vld [vmem:[%s0] sm:$0x3]
    %v22 = vld [vmem:[%s1] sm:$0xff]
    %v23 = vld [vmem:[%s1 + $0x8] sm:$0xff]
    %v24 = vld [vmem:[%s1 + $0x10] sm:$0xff]
    %v25 = vld [vmem:[%s1 + $0x18] sm:$0xff]
    %v26 = vld [vmem:[%s2] sm:$0x1]
    %v28 = vlaneseq
    %v29 = vshrl.u32 %v28, 7
    %v30 = vsub.s32 0, %v29
    %v31 = vrot.slane %v26, %v30
    %vm33 = vcmask 261120
    %v35 = vsel %vm33, %v21, 0
    %37 = vmatprep.subr.mxu0 0.0
    %38 = vmatpush1.msra.mxu0 %v22
    %39 = vmatprep.subr.mxu0 0.0
    %40 = vmatpush1.msra.mxu0 %v23
    %41 = vmatprep.subr.mxu0 0.0
    %42 = vmatpush1.msra.mxu0 %v24
    %43 = vmatprep.subr.mxu0 0.0
    %44 = vmatpush1.msra.mxu0 %v25
    %45 = vmatprep.subr.mxu0 0.0
    %46 = vmatpush1.msra.mxu0 0.0
    %47 = vmatprep.subr.mxu0 0.0
    %48 = vmatpush1.msra.mxu0 0.0
    %49 = vmatprep.subr.mxu0 0.0
    %50 = vmatpush1.msra.mxu0 0.0
    %51 = vmatprep.subr.mxu0 0.0
    %52 = vmatpush1.msra.mxu0 0.0
    %53 = vmatprep.subr.mxu0 0.0
    %54 = vmatpush1.msra.mxu0 0.0
    %55 = vmatprep.subr.mxu0 0.0
    %56 = vmatpush1.msra.mxu0 0.0
    %57 = vmatprep.subr.mxu0 0.0
    %58 = vmatpush1.msra.mxu0 0.0
    %59 = vmatprep.subr.mxu0 0.0
    %60 = vmatpush1.msra.mxu0 0.0
    %61 = vmatprep.subr.mxu0 0.0
    %62 = vmatpush1.msra.mxu0 0.0
    %63 = vmatprep.subr.mxu0 0.0
    %64 = vmatpush1.msra.mxu0 0.0
    %65 = vmatprep.subr.mxu0 0.0
    %66 = vmatpush1.msra.mxu0 0.0
    %67 = vmatprep.subr.mxu0 0.0
    %68 = vmatpush1.msra.mxu0 0.0
    %69 = vmatprep.subr.mxu0 0.0
    %70 = vmatpush1.msra.mxu0 0.0
    %71 = vmatprep.subr.mxu0 0.0
    %72 = vmatpush1.msra.mxu0 0.0
    %73 = vmatprep.subr.mxu0 0.0
    %74 = vmatpush1.msra.mxu0 0.0
    %75 = vmatprep.subr.mxu0 0.0
    %76 = vmatpush1.msra.mxu0 0.0
    %77 = vmatprep.subr.mxu0 0.0
    %78 = vmatpush1.msra.mxu0 0.0
    %79 = vmatprep.subr.mxu0 0.0
    %80 = vmatpush1.msra.mxu0 0.0
    %81 = vmatprep.subr.mxu0 0.0
    %82 = vmatpush1.msra.mxu0 0.0
    %83 = vmatprep.subr.mxu0 0.0
    %84 = vmatpush1.msra.mxu0 0.0
    %85 = vmatprep.subr.mxu0 0.0
    %86 = vmatpush1.msra.mxu0 0.0
    %87 = vmatprep.subr.mxu0 0.0
    %88 = vmatpush1.msra.mxu0 0.0
    %89 = vmatprep.subr.mxu0 0.0
    %90 = vmatpush1.msra.mxu0 0.0
    %91 = vmatprep.subr.mxu0 0.0
    %92 = vmatpush1.msra.mxu0 0.0
    %93 = vmatprep.subr.mxu0 0.0
    %94 = vmatpush1.msra.mxu0 0.0
    %95 = vmatprep.subr.mxu0 0.0
    %96 = vmatpush1.msra.mxu0 0.0
    %97 = vmatprep.subr.mxu0 0.0
    %98 = vmatpush1.msra.mxu0 0.0
    %99 = vmatprep.subr.mxu0 0.0
    %100 = vmatpush1.msra.mxu0 0.0
    %101 = vmatprep.mubr.f32.mxu0 0.0
    %102 = vmatmul.mubr.f32.gmra.mrb[0].mxu0 %v35
    %v103 = vpop.f32.mrb[0].mxu0
    %v104 = vadd.f32 %v31, %v103
    %v105 = vpop.f32.mrb[0].mxu0
    %106 = vdwg.mxu0
    %v107 = vtanh.pop %v104
    %v108 = vld [vmem:[%s3] sm:$0xff]
    %v109 = vld [vmem:[%s3 + $0x8] sm:$0xff]
    %v110 = vld [vmem:[%s3 + $0x10] sm:$0xff]
    %v111 = vld [vmem:[%s3 + $0x18] sm:$0xff]
    %v112 = vld [vmem:[%s4] sm:$0x1]
    %v114 = vlaneseq
    %v115 = vshrl.u32 %v114, 7
    %v116 = vsub.s32 0, %v115
    %v117 = vrot.slane %v112, %v116
    %v120 = vsel %vm33, %v107, 0
    %122 = vmatprep.subr.mxu0 0.0
    %123 = vmatpush1.msra.mxu0 %v108
    %124 = vmatprep.subr.mxu0 0.0
    %125 = vmatpush1.msra.mxu0 %v109
    %126 = vmatprep.subr.mxu0 0.0
    %127 = vmatpush1.msra.mxu0 %v110
    %128 = vmatprep.subr.mxu0 0.0
    %129 = vmatpush1.msra.mxu0 %v111
    %130 = vmatprep.subr.mxu0 0.0
    %131 = vmatpush1.msra.mxu0 0.0
    %132 = vmatprep.subr.mxu0 0.0
    %133 = vmatpush1.msra.mxu0 0.0
    %134 = vmatprep.subr.mxu0 0.0
    %135 = vmatpush1.msra.mxu0 0.0
    %136 = vmatprep.subr.mxu0 0.0
    %137 = vmatpush1.msra.mxu0 0.0
    %138 = vmatprep.subr.mxu0 0.0
    %139 = vmatpush1.msra.mxu0 0.0
    %140 = vmatprep.subr.mxu0 0.0
    %141 = vmatpush1.msra.mxu0 0.0
    %142 = vmatprep.subr.mxu0 0.0
    %143 = vmatpush1.msra.mxu0 0.0
    %144 = vmatprep.subr.mxu0 0.0
    %145 = vmatpush1.msra.mxu0 0.0
    %146 = vmatprep.subr.mxu0 0.0
    %147 = vmatpush1.msra.mxu0 0.0
    %148 = vmatprep.subr.mxu0 0.0
    %149 = vmatpush1.msra.mxu0 0.0
    %150 = vmatprep.subr.mxu0 0.0
    %151 = vmatpush1.msra.mxu0 0.0
    %152 = vmatprep.subr.mxu0 0.0
    %153 = vmatpush1.msra.mxu0 0.0
    %154 = vmatprep.subr.mxu0 0.0
    %155 = vmatpush1.msra.mxu0 0.0
    %156 = vmatprep.subr.mxu0 0.0
    %157 = vmatpush1.msra.mxu0 0.0
    %158 = vmatprep.subr.mxu0 0.0
    %159 = vmatpush1.msra.mxu0 0.0
    %160 = vmatprep.subr.mxu0 0.0
    %161 = vmatpush1.msra.mxu0 0.0
    %162 = vmatprep.subr.mxu0 0.0
    %163 = vmatpush1.msra.mxu0 0.0
    %164 = vmatprep.subr.mxu0 0.0
    %165 = vmatpush1.msra.mxu0 0.0
    %166 = vmatprep.subr.mxu0 0.0
    %167 = vmatpush1.msra.mxu0 0.0
    %168 = vmatprep.subr.mxu0 0.0
    %169 = vmatpush1.msra.mxu0 0.0
    %170 = vmatprep.subr.mxu0 0.0
    %171 = vmatpush1.msra.mxu0 0.0
    %172 = vmatprep.subr.mxu0 0.0
    %173 = vmatpush1.msra.mxu0 0.0
    %174 = vmatprep.subr.mxu0 0.0
    %175 = vmatpush1.msra.mxu0 0.0
    %176 = vmatprep.subr.mxu0 0.0
    %177 = vmatpush1.msra.mxu0 0.0
    %178 = vmatprep.subr.mxu0 0.0
    %179 = vmatpush1.msra.mxu0 0.0
    %180 = vmatprep.subr.mxu0 0.0
    %181 = vmatpush1.msra.mxu0 0.0
    %182 = vmatprep.subr.mxu0 0.0
    %183 = vmatpush1.msra.mxu0 0.0
    %184 = vmatprep.subr.mxu0 0.0
    %185 = vmatpush1.msra.mxu0 0.0
    %186 = vmatprep.mubr.f32.mxu0 0.0
    %187 = vmatmul.mubr.f32.gmra.mrb[0].mxu0 %v120
    %v188 = vpop.f32.mrb[0].mxu0
    %v189 = vadd.f32 %v117, %v188
    %v190 = vpop.f32.mrb[0].mxu0
    %191 = vdwg.mxu0
    %192 = vst [vmem:[#allocation2] sm:$0x3] %v189
    // Predicated region
    $region22: #{kcbert_forward.3} parent=1 // pred_check
      _
    $region23: #{kcbert_forward.3} parent=1 // pred_check_branch
      %194 = sbr.rel (0) target = $region25
    $region24: #{kcbert_forward.3} parent=1 // pred_region
      %s196 = ssub.s32 32, 32
      %197 = vsyncadd [#allocation3], %s196
      %s199 = sshll.u32 [#allocation2], 4
      %s200 = int_to_ptr.vmem [resolvable:$true] %s199
      %202 = dma.vmem_to_hbm [thread:$0]  %s200, 32, %s5, [#allocation3]
    $region25: #{kcbert_forward.3} parent=1 // pred_fallthru
      _
    // Predicated region
    $region26: #{kcbert_forward.3} parent=1 // pred_check
      _
    $region27: #{kcbert_forward.3} parent=1 // pred_check_branch
      %204 = sbr.rel (0) target = $region29
    $region28: #{kcbert_forward.3} parent=1 // pred_region
      %205 = dma.done [#allocation3], 32
    $region29: #{kcbert_forward.3} parent=1 // pred_fallthru
      _
    %206 = vsyncpa [#allocation3], 1

// kernel: kcbert_forward.2
$region0: #{kcbert_forward.2}
  #allocation0 [shape = 'u32[]', space=smem, size = 0x4, offset = 0x4, fixed_abs, tag = 'smem constant byte address 0x4 - core index']
  #allocation1 [shape = 'u32[144,128]{1,0:T(1,128)}', space=vmem, size = 0x12000, scoped, tag = 'internal scratch']
  %s0 = inlined_call_operand.vmem [shape: f32[16,32], index: 0, kind: input, shape index: {}]
  %s1 = inlined_call_operand.vmem [shape: f32[2,1,8], index: 1, kind: input, shape index: {}]
  %s2 = inlined_call_operand.vmem [shape: f32[1,32], index: 2, kind: input, shape index: {}]
  %s3 = inlined_call_operand.vmem [shape: f32[1,32], index: 3, kind: input, shape index: {}]
  %s4 = inlined_call_operand.vmem [shape: f32[2,32,96], index: 4, kind: input, shape index: {}]
  %s5 = inlined_call_operand.vmem [shape: f32[2,1,96], index: 5, kind: input, shape index: {}]
  %s6 = inlined_call_operand.vmem [shape: f32[2,32,32], index: 6, kind: input, shape index: {}]
  %s7 = inlined_call_operand.vmem [shape: f32[2,1,32], index: 7, kind: input, shape index: {}]
  %s8 = inlined_call_operand.vmem [shape: f32[2,1,32], index: 8, kind: input, shape index: {}]
  %s9 = inlined_call_operand.vmem [shape: f32[2,1,32], index: 9, kind: input, shape index: {}]
  %s10 = inlined_call_operand.vmem [shape: f32[2,32,64], index: 10, kind: input, shape index: {}]
  %s11 = inlined_call_operand.vmem [shape: f32[2,1,64], index: 11, kind: input, shape index: {}]
  %s12 = inlined_call_operand.vmem [shape: f32[2,64,32], index: 12, kind: input, shape index: {}]
  %s13 = inlined_call_operand.vmem [shape: f32[2,1,32], index: 13, kind: input, shape index: {}]
  %s14 = inlined_call_operand.vmem [shape: f32[2,1,32], index: 14, kind: input, shape index: {}]
  %s15 = inlined_call_operand.vmem [shape: f32[2,1,32], index: 15, kind: input, shape index: {}]
  %s16 = inlined_call_operand.vmem [shape: f32[16,32], index: 16, kind: output, shape index: {}]
  %s17 = sld [smem:[#allocation0]]
  $region101: #{kcbert_forward.2} parent=0
    _
  %s19 = ssub.s32 1, %s17
  %s20 = scalar_select 0, %s19, %s17
  loop: start=0, step=1, limit=4
  $region2: #{kcbert_forward.2} parent=0 // loop_pre_header
    _
  $region3: #{kcbert_forward.2} parent=0 // loop_header
    %s22 = sphi 0, %s26
    %p23 = scmp.ge.s32.totalorder %s22, 4
    %s30 = sphi 0, %s30
    %s32 = sphi 0, %s30
    %s33 = sphi 0, %s32
    %s47 = sphi 0, %s33
    %s51 = sphi 0, %s51
    %s53 = sphi 0, %s51
    %s54 = sphi 0, %s53
    %s68 = sphi 0, %s54
    %s72 = sphi 0, %s72
    %s74 = sphi 0, %s72
    %s75 = sphi 0, %s74
    %s89 = sphi 0, %s75
    %s93 = sphi 0, %s93
    %s95 = sphi 0, %s93
    %s96 = sphi 0, %s95
    %s110 = sphi 0, %s96
    %s116 = sphi 0, %s118
    %s119 = sphi 0, %s116
    %s120 = sphi 0, %s119
    %s136 = sphi 0, %s120
    %s142 = sphi 0, %s144
    %s145 = sphi 0, %s142
    %s146 = sphi 0, %s145
    %s162 = sphi 0, %s146
    %s168 = sphi 0, %s170
    %s171 = sphi 0, %s168
    %s172 = sphi 0, %s171
    %s188 = sphi 0, %s172
    %s194 = sphi 0, %s196
    %s197 = sphi 0, %s194
    %s198 = sphi 0, %s197
    %s214 = sphi 0, %s198
    %s220 = sphi 0, %s222
    %s223 = sphi 0, %s220
    %s224 = sphi 0, %s223
    %s240 = sphi 0, %s224
    %s246 = sphi 0, %s248
    %s249 = sphi 0, %s246
    %s250 = sphi 0, %s249
    %s266 = sphi 0, %s250
    %s272 = sphi 0, %s274
    %s275 = sphi 0, %s272
    %s276 = sphi 0, %s275
    %s292 = sphi 0, %s276
    %s298 = sphi 0, %s300
    %s301 = sphi 0, %s298
    %s302 = sphi 0, %s301
    %s318 = sphi 0, %s302
    %s324 = sphi 0, %s326
    %s327 = sphi 0, %s324
    %s328 = sphi 0, %s327
    %s344 = sphi 0, %s328
    %s350 = sphi 0, %s352
    %s353 = sphi 0, %s350
    %s354 = sphi 0, %s353
    %s370 = sphi 0, %s354
    %s376 = sphi 0, %s378
    %s379 = sphi 0, %s376
    %s380 = sphi 0, %s379
    %s396 = sphi 0, %s380
    %s402 = sphi 0, %s404
    %s405 = sphi 0, %s402
    %s406 = sphi 0, %s405
    %s422 = sphi 0, %s406
    %s426 = sphi 0, %s426
    %s428 = sphi 0, %s426
    %s429 = sphi 0, %s428
    %s443 = sphi 0, %s429
  $region4: #{kcbert_forward.2} parent=0 // loop_header_branch
    %25 = sbr.rel (%p23) target = $region8
  $region5: #{kcbert_forward.2} parent=0 // loop_body
    %s27 = ssub.s32 %s22, 1
    %s28 = ssub.s32 %s22, 2
    %s29 = sadd.s32 %s22, 1
    %s31 = sadd.s32 %s30, 1
    %p34 = scmp.eq.s32.totalorder %s22, 1
    %p35 = scmp.ne.s32.totalorder %s30, %s32
    %p36 = scmp.eq.s32.totalorder %s22, 0
    %p37 = por %p35, %p36
    %p38 = scmp.ne.s32.totalorder %s30, %s32
    %p39 = scmp.eq.s32.totalorder %s27, 1
    %p40 = por %p38, %p39
    %p41 = scmp.ne.s32.totalorder %s32, %s33
    %p42 = scmp.eq.s32.totalorder %s27, 0
    %p43 = por %p41, %p42
    %p44 = scmp.ne.s32.totalorder %s32, %s33
    %p45 = scmp.eq.s32.totalorder %s28, 1
    %p46 = por %p44, %p45
    %p48 = scmp.ne.s32.totalorder %s33, %s47
    %p49 = scmp.eq.s32.totalorder %s28, 0
    %p50 = por %p48, %p49
    %s52 = sadd.s32 %s51, 1
    %p55 = scmp.eq.s32.totalorder %s22, 1
    %p56 = scmp.ne.s32.totalorder %s51, %s53
    %p57 = scmp.eq.s32.totalorder %s22, 0
    %p58 = por %p56, %p57
    %p59 = scmp.ne.s32.totalorder %s51, %s53
    %p60 = scmp.eq.s32.totalorder %s27, 1
    %p61 = por %p59, %p60
    %p62 = scmp.ne.s32.totalorder %s53, %s54
    %p63 = scmp.eq.s32.totalorder %s27, 0
    %p64 = por %p62, %p63
    %p65 = scmp.ne.s32.totalorder %s53, %s54
    %p66 = scmp.eq.s32.totalorder %s28, 1
    %p67 = por %p65, %p66
    %p69 = scmp.ne.s32.totalorder %s54, %s68
    %p70 = scmp.eq.s32.totalorder %s28, 0
    %p71 = por %p69, %p70
    %s73 = sadd.s32 %s72, 1
    %p76 = scmp.eq.s32.totalorder %s22, 1
    %p77 = scmp.ne.s32.totalorder %s72, %s74
    %p78 = scmp.eq.s32.totalorder %s22, 0
    %p79 = por %p77, %p78
    %p80 = scmp.ne.s32.totalorder %s72, %s74
    %p81 = scmp.eq.s32.totalorder %s27, 1
    %p82 = por %p80, %p81
    %p83 = scmp.ne.s32.totalorder %s74, %s75
    %p84 = scmp.eq.s32.totalorder %s27, 0
    %p85 = por %p83, %p84
    %p86 = scmp.ne.s32.totalorder %s74, %s75
    %p87 = scmp.eq.s32.totalorder %s28, 1
    %p88 = por %p86, %p87
    %p90 = scmp.ne.s32.totalorder %s75, %s89
    %p91 = scmp.eq.s32.totalorder %s28, 0
    %p92 = por %p90, %p91
    %s94 = sadd.s32 %s93, 1
    %p97 = scmp.eq.s32.totalorder %s22, 1
    %p98 = scmp.ne.s32.totalorder %s93, %s95
    %p99 = scmp.eq.s32.totalorder %s22, 0
    %p100 = por %p98, %p99
    %p101 = scmp.ne.s32.totalorder %s93, %s95
    %p102 = scmp.eq.s32.totalorder %s27, 1
    %p103 = por %p101, %p102
    %p104 = scmp.ne.s32.totalorder %s95, %s96
    %p105 = scmp.eq.s32.totalorder %s27, 0
    %p106 = por %p104, %p105
    %p107 = scmp.ne.s32.totalorder %s95, %s96
    %p108 = scmp.eq.s32.totalorder %s28, 1
    %p109 = por %p107, %p108
    %p111 = scmp.ne.s32.totalorder %s96, %s110
    %p112 = scmp.eq.s32.totalorder %s28, 0
    %p113 = por %p111, %p112
    %s114 = ssub.s32 %s22, %s29
    %p115 = scmp.eq.s32.totalorder %s114, 0
    %s117 = sadd.s32 %s116, 1
    %s118 = scalar_select %p115, %s116, %s117
    %p121 = pneg %p115
    %p122 = scmp.eq.s32.totalorder %s22, 1
    %p123 = por %p121, %p122
    %p124 = scmp.ne.s32.totalorder %s116, %s119
    %p125 = scmp.eq.s32.totalorder %s22, 0
    %p126 = por %p124, %p125
    %p127 = scmp.ne.s32.totalorder %s116, %s119
    %p128 = scmp.eq.s32.totalorder %s27, 1
    %p129 = por %p127, %p128
    %p130 = scmp.ne.s32.totalorder %s119, %s120
    %p131 = scmp.eq.s32.totalorder %s27, 0
    %p132 = por %p130, %p131
    %p133 = scmp.ne.s32.totalorder %s119, %s120
    %p134 = scmp.eq.s32.totalorder %s28, 1
    %p135 = por %p133, %p134
    %p137 = scmp.ne.s32.totalorder %s120, %s136
    %p138 = scmp.eq.s32.totalorder %s28, 0
    %p139 = por %p137, %p138
    %s140 = ssub.s32 %s22, %s29
    %p141 = scmp.eq.s32.totalorder %s140, 0
    %s143 = sadd.s32 %s142, 1
    %s144 = scalar_select %p141, %s142, %s143
    %p147 = pneg %p141
    %p148 = scmp.eq.s32.totalorder %s22, 1
    %p149 = por %p147, %p148
    %p150 = scmp.ne.s32.totalorder %s142, %s145
    %p151 = scmp.eq.s32.totalorder %s22, 0
    %p152 = por %p150, %p151
    %p153 = scmp.ne.s32.totalorder %s142, %s145
    %p154 = scmp.eq.s32.totalorder %s27, 1
    %p155 = por %p153, %p154
    %p156 = scmp.ne.s32.totalorder %s145, %s146
    %p157 = scmp.eq.s32.totalorder %s27, 0
    %p158 = por %p156, %p157
    %p159 = scmp.ne.s32.totalorder %s145, %s146
    %p160 = scmp.eq.s32.totalorder %s28, 1
    %p161 = por %p159, %p160
    %p163 = scmp.ne.s32.totalorder %s146, %s162
    %p164 = scmp.eq.s32.totalorder %s28, 0
    %p165 = por %p163, %p164
    %s166 = ssub.s32 %s22, %s29
    %p167 = scmp.eq.s32.totalorder %s166, 0
    %s169 = sadd.s32 %s168, 1
    %s170 = scalar_select %p167, %s168, %s169
    %p173 = pneg %p167
    %p174 = scmp.eq.s32.totalorder %s22, 1
    %p175 = por %p173, %p174
    %p176 = scmp.ne.s32.totalorder %s168, %s171
    %p177 = scmp.eq.s32.totalorder %s22, 0
    %p178 = por %p176, %p177
    %p179 = scmp.ne.s32.totalorder %s168, %s171
    %p180 = scmp.eq.s32.totalorder %s27, 1
    %p181 = por %p179, %p180
    %p182 = scmp.ne.s32.totalorder %s171, %s172
    %p183 = scmp.eq.s32.totalorder %s27, 0
    %p184 = por %p182, %p183
    %p185 = scmp.ne.s32.totalorder %s171, %s172
    %p186 = scmp.eq.s32.totalorder %s28, 1
    %p187 = por %p185, %p186
    %p189 = scmp.ne.s32.totalorder %s172, %s188
    %p190 = scmp.eq.s32.totalorder %s28, 0
    %p191 = por %p189, %p190
    %s192 = ssub.s32 %s22, %s29
    %p193 = scmp.eq.s32.totalorder %s192, 0
    %s195 = sadd.s32 %s194, 1
    %s196 = scalar_select %p193, %s194, %s195
    %p199 = pneg %p193
    %p200 = scmp.eq.s32.totalorder %s22, 1
    %p201 = por %p199, %p200
    %p202 = scmp.ne.s32.totalorder %s194, %s197
    %p203 = scmp.eq.s32.totalorder %s22, 0
    %p204 = por %p202, %p203
    %p205 = scmp.ne.s32.totalorder %s194, %s197
    %p206 = scmp.eq.s32.totalorder %s27, 1
    %p207 = por %p205, %p206
    %p208 = scmp.ne.s32.totalorder %s197, %s198
    %p209 = scmp.eq.s32.totalorder %s27, 0
    %p210 = por %p208, %p209
    %p211 = scmp.ne.s32.totalorder %s197, %s198
    %p212 = scmp.eq.s32.totalorder %s28, 1
    %p213 = por %p211, %p212
    %p215 = scmp.ne.s32.totalorder %s198, %s214
    %p216 = scmp.eq.s32.totalorder %s28, 0
    %p217 = por %p215, %p216
    %s218 = ssub.s32 %s22, %s29
    %p219 = scmp.eq.s32.totalorder %s218, 0
    %s221 = sadd.s32 %s220, 1
    %s222 = scalar_select %p219, %s220, %s221
    %p225 = pneg %p219
    %p226 = scmp.eq.s32.totalorder %s22, 1
    %p227 = por %p225, %p226
    %p228 = scmp.ne.s32.totalorder %s220, %s223
    %p229 = scmp.eq.s32.totalorder %s22, 0
    %p230 = por %p228, %p229
    %p231 = scmp.ne.s32.totalorder %s220, %s223
    %p232 = scmp.eq.s32.totalorder %s27, 1
    %p233 = por %p231, %p232
    %p234 = scmp.ne.s32.totalorder %s223, %s224
    %p235 = scmp.eq.s32.totalorder %s27, 0
    %p236 = por %p234, %p235
    %p237 = scmp.ne.s32.totalorder %s223, %s224
    %p238 = scmp.eq.s32.totalorder %s28, 1
    %p239 = por %p237, %p238
    %p241 = scmp.ne.s32.totalorder %s224, %s240
    %p242 = scmp.eq.s32.totalorder %s28, 0
    %p243 = por %p241, %p242
    %s244 = ssub.s32 %s22, %s29
    %p245 = scmp.eq.s32.totalorder %s244, 0
    %s247 = sadd.s32 %s246, 1
    %s248 = scalar_select %p245, %s246, %s247
    %p251 = pneg %p245
    %p252 = scmp.eq.s32.totalorder %s22, 1
    %p253 = por %p251, %p252
    %p254 = scmp.ne.s32.totalorder %s246, %s249
    %p255 = scmp.eq.s32.totalorder %s22, 0
    %p256 = por %p254, %p255
    %p257 = scmp.ne.s32.totalorder %s246, %s249
    %p258 = scmp.eq.s32.totalorder %s27, 1
    %p259 = por %p257, %p258
    %p260 = scmp.ne.s32.totalorder %s249, %s250
    %p261 = scmp.eq.s32.totalorder %s27, 0
    %p262 = por %p260, %p261
    %p263 = scmp.ne.s32.totalorder %s249, %s250
    %p264 = scmp.eq.s32.totalorder %s28, 1
    %p265 = por %p263, %p264
    %p267 = scmp.ne.s32.totalorder %s250, %s266
    %p268 = scmp.eq.s32.totalorder %s28, 0
    %p269 = por %p267, %p268
    %s270 = ssub.s32 %s22, %s29
    %p271 = scmp.eq.s32.totalorder %s270, 0
    %s273 = sadd.s32 %s272, 1
    %s274 = scalar_select %p271, %s272, %s273
    %p277 = pneg %p271
    %p278 = scmp.eq.s32.totalorder %s22, 1
    %p279 = por %p277, %p278
    %p280 = scmp.ne.s32.totalorder %s272, %s275
    %p281 = scmp.eq.s32.totalorder %s22, 0
    %p282 = por %p280, %p281
    %p283 = scmp.ne.s32.totalorder %s272, %s275
    %p284 = scmp.eq.s32.totalorder %s27, 1
    %p285 = por %p283, %p284
    %p286 = scmp.ne.s32.totalorder %s275, %s276
    %p287 = scmp.eq.s32.totalorder %s27, 0
    %p288 = por %p286, %p287
    %p289 = scmp.ne.s32.totalorder %s275, %s276
    %p290 = scmp.eq.s32.totalorder %s28, 1
    %p291 = por %p289, %p290
    %p293 = scmp.ne.s32.totalorder %s276, %s292
    %p294 = scmp.eq.s32.totalorder %s28, 0
    %p295 = por %p293, %p294
    %s296 = ssub.s32 %s22, %s29
    %p297 = scmp.eq.s32.totalorder %s296, 0
    %s299 = sadd.s32 %s298, 1
    %s300 = scalar_select %p297, %s298, %s299
    %p303 = pneg %p297
    %p304 = scmp.eq.s32.totalorder %s22, 1
    %p305 = por %p303, %p304
    %p306 = scmp.ne.s32.totalorder %s298, %s301
    %p307 = scmp.eq.s32.totalorder %s22, 0
    %p308 = por %p306, %p307
    %p309 = scmp.ne.s32.totalorder %s298, %s301
    %p310 = scmp.eq.s32.totalorder %s27, 1
    %p311 = por %p309, %p310
    %p312 = scmp.ne.s32.totalorder %s301, %s302
    %p313 = scmp.eq.s32.totalorder %s27, 0
    %p314 = por %p312, %p313
    %p315 = scmp.ne.s32.totalorder %s301, %s302
    %p316 = scmp.eq.s32.totalorder %s28, 1
    %p317 = por %p315, %p316
    %p319 = scmp.ne.s32.totalorder %s302, %s318
    %p320 = scmp.eq.s32.totalorder %s28, 0
    %p321 = por %p319, %p320
    %s322 = ssub.s32 %s22, %s29
    %p323 = scmp.eq.s32.totalorder %s322, 0
    %s325 = sadd.s32 %s324, 1
    %s326 = scalar_select %p323, %s324, %s325
    %p329 = pneg %p323
    %p330 = scmp.eq.s32.totalorder %s22, 1
    %p331 = por %p329, %p330
    %p332 = scmp.ne.s32.totalorder %s324, %s327
    %p333 = scmp.eq.s32.totalorder %s22, 0
    %p334 = por %p332, %p333
    %p335 = scmp.ne.s32.totalorder %s324, %s327
    %p336 = scmp.eq.s32.totalorder %s27, 1
    %p337 = por %p335, %p336
    %p338 = scmp.ne.s32.totalorder %s327, %s328
    %p339 = scmp.eq.s32.totalorder %s27, 0
    %p340 = por %p338, %p339
    %p341 = scmp.ne.s32.totalorder %s327, %s328
    %p342 = scmp.eq.s32.totalorder %s28, 1
    %p343 = por %p341, %p342
    %p345 = scmp.ne.s32.totalorder %s328, %s344
    %p346 = scmp.eq.s32.totalorder %s28, 0
    %p347 = por %p345, %p346
    %s348 = ssub.s32 %s22, %s29
    %p349 = scmp.eq.s32.totalorder %s348, 0
    %s351 = sadd.s32 %s350, 1
    %s352 = scalar_select %p349, %s350, %s351
    %p355 = pneg %p349
    %p356 = scmp.eq.s32.totalorder %s22, 1
    %p357 = por %p355, %p356
    %p358 = scmp.ne.s32.totalorder %s350, %s353
    %p359 = scmp.eq.s32.totalorder %s22, 0
    %p360 = por %p358, %p359
    %p361 = scmp.ne.s32.totalorder %s350, %s353
    %p362 = scmp.eq.s32.totalorder %s27, 1
    %p363 = por %p361, %p362
    %p364 = scmp.ne.s32.totalorder %s353, %s354
    %p365 = scmp.eq.s32.totalorder %s27, 0
    %p366 = por %p364, %p365
    %p367 = scmp.ne.s32.totalorder %s353, %s354
    %p368 = scmp.eq.s32.totalorder %s28, 1
    %p369 = por %p367, %p368
    %p371 = scmp.ne.s32.totalorder %s354, %s370
    %p372 = scmp.eq.s32.totalorder %s28, 0
    %p373 = por %p371, %p372
    %s374 = ssub.s32 %s22, %s29
    %p375 = scmp.eq.s32.totalorder %s374, 0
    %s377 = sadd.s32 %s376, 1
    %s378 = scalar_select %p375, %s376, %s377
    %p381 = pneg %p375
    %p382 = scmp.eq.s32.totalorder %s22, 1
    %p383 = por %p381, %p382
    %p384 = scmp.ne.s32.totalorder %s376, %s379
    %p385 = scmp.eq.s32.totalorder %s22, 0
    %p386 = por %p384, %p385
    %p387 = scmp.ne.s32.totalorder %s376, %s379
    %p388 = scmp.eq.s32.totalorder %s27, 1
    %p389 = por %p387, %p388
    %p390 = scmp.ne.s32.totalorder %s379, %s380
    %p391 = scmp.eq.s32.totalorder %s27, 0
    %p392 = por %p390, %p391
    %p393 = scmp.ne.s32.totalorder %s379, %s380
    %p394 = scmp.eq.s32.totalorder %s28, 1
    %p395 = por %p393, %p394
    %p397 = scmp.ne.s32.totalorder %s380, %s396
    %p398 = scmp.eq.s32.totalorder %s28, 0
    %p399 = por %p397, %p398
    %s400 = ssub.s32 %s22, %s29
    %p401 = scmp.eq.s32.totalorder %s400, 0
    %s403 = sadd.s32 %s402, 1
    %s404 = scalar_select %p401, %s402, %s403
    %p407 = pneg %p401
    %p408 = scmp.eq.s32.totalorder %s22, 1
    %p409 = por %p407, %p408
    %p410 = scmp.ne.s32.totalorder %s402, %s405
    %p411 = scmp.eq.s32.totalorder %s22, 0
    %p412 = por %p410, %p411
    %p413 = scmp.ne.s32.totalorder %s402, %s405
    %p414 = scmp.eq.s32.totalorder %s27, 1
    %p415 = por %p413, %p414
    %p416 = scmp.ne.s32.totalorder %s405, %s406
    %p417 = scmp.eq.s32.totalorder %s27, 0
    %p418 = por %p416, %p417
    %p419 = scmp.ne.s32.totalorder %s405, %s406
    %p420 = scmp.eq.s32.totalorder %s28, 1
    %p421 = por %p419, %p420
    %p423 = scmp.ne.s32.totalorder %s406, %s422
    %p424 = scmp.eq.s32.totalorder %s28, 0
    %p425 = por %p423, %p424
    %s427 = sadd.s32 %s426, 1
    %p430 = scmp.eq.s32.totalorder %s22, 1
    %p431 = scmp.ne.s32.totalorder %s426, %s428
    %p432 = scmp.eq.s32.totalorder %s22, 0
    %p433 = por %p431, %p432
    %p434 = scmp.ne.s32.totalorder %s426, %s428
    %p435 = scmp.eq.s32.totalorder %s27, 1
    %p436 = por %p434, %p435
    %p437 = scmp.ne.s32.totalorder %s428, %s429
    %p438 = scmp.eq.s32.totalorder %s27, 0
    %p439 = por %p437, %p438
    %p440 = scmp.ne.s32.totalorder %s428, %s429
    %p441 = scmp.eq.s32.totalorder %s28, 1
    %p442 = por %p440, %p441
    %p444 = scmp.ne.s32.totalorder %s429, %s443
    %p445 = scmp.eq.s32.totalorder %s28, 0
    %p446 = por %p444, %p445
    %p447 = scmp.le.s32.totalorder 1, %s22
    %p448 = scmp.lt.s32.totalorder %s22, 3
    %p449 = pnand %p447, %p448
    %p450 = pneg %p449
    // Predicated region
    $region9: #{kcbert_forward.2} parent=5 // pred_check
      _
    $region10: #{kcbert_forward.2} parent=5 // pred_check_branch
      %452 = sbr.rel (%p449) target = $region12
    $region11: #{kcbert_forward.2} parent=5 // pred_region
      %s453 = ssub.s32 %s22, 1
      // Predicated region
      $region13: #{kcbert_forward.2} parent=11 // pred_check
        %p454 = pneg %p43
      $region14: #{kcbert_forward.2} parent=11 // pred_check_branch
        %456 = sbr.rel (%p454) target = $region16
      $region15: #{kcbert_forward.2} parent=11 // pred_region
        _
      $region16: #{kcbert_forward.2} parent=11 // pred_fallthru
        _
      // Predicated region
      $region17: #{kcbert_forward.2} parent=11 // pred_check
        %p457 = pneg %p64
      $region18: #{kcbert_forward.2} parent=11 // pred_check_branch
        %459 = sbr.rel (%p457) target = $region20
      $region19: #{kcbert_forward.2} parent=11 // pred_region
        _
      $region20: #{kcbert_forward.2} parent=11 // pred_fallthru
        _
      // Predicated region
      $region21: #{kcbert_forward.2} parent=11 // pred_check
        %p460 = pneg %p85
      $region22: #{kcbert_forward.2} parent=11 // pred_check_branch
        %462 = sbr.rel (%p460) target = $region24
      $region23: #{kcbert_forward.2} parent=11 // pred_region
        _
      $region24: #{kcbert_forward.2} parent=11 // pred_fallthru
        _
      // Predicated region
      $region25: #{kcbert_forward.2} parent=11 // pred_check
        %p463 = pneg %p106
      $region26: #{kcbert_forward.2} parent=11 // pred_check_branch
        %465 = sbr.rel (%p463) target = $region28
      $region27: #{kcbert_forward.2} parent=11 // pred_region
        _
      $region28: #{kcbert_forward.2} parent=11 // pred_fallthru
        _
    $region12: #{kcbert_forward.2} parent=5 // pred_fallthru
      _
    %p466 = scmp.lt.s32.totalorder %s22, 2
    // Predicated region
    $region29: #{kcbert_forward.2} parent=5 // pred_check
      %p467 = pneg %p466
    $region30: #{kcbert_forward.2} parent=5 // pred_check_branch
      %469 = sbr.rel (%p467) target = $region32
    $region31: #{kcbert_forward.2} parent=5 // pred_region
      // Predicated region
      $region33: #{kcbert_forward.2} parent=31 // pred_check
        %p470 = pneg %p126
      $region34: #{kcbert_forward.2} parent=31 // pred_check_branch
        %472 = sbr.rel (%p470) target = $region36
      $region35: #{kcbert_forward.2} parent=31 // pred_region
        %p473 = scmp.lt.s32.totalorder %s22, 1
        %s474 = scalar_select %p473, %s22, 1
        %s475 = smul.addr %s474, 4
        %s476 = smul.addr %s475, 8
        %s477 = scalar_lea.vmem %s4, %s476
      $region36: #{kcbert_forward.2} parent=31 // pred_fallthru
        _
      // Predicated region
      $region37: #{kcbert_forward.2} parent=31 // pred_check
        %p478 = pneg %p152
      $region38: #{kcbert_forward.2} parent=31 // pred_check_branch
        %480 = sbr.rel (%p478) target = $region40
      $region39: #{kcbert_forward.2} parent=31 // pred_region
        %p481 = scmp.lt.s32.totalorder %s22, 1
        %s482 = scalar_select %p481, %s22, 1
        %s483 = scalar_lea.vmem %s5, %s482
      $region40: #{kcbert_forward.2} parent=31 // pred_fallthru
        _
      // Predicated region
      $region41: #{kcbert_forward.2} parent=31 // pred_check
        %p484 = pneg %p178
      $region42: #{kcbert_forward.2} parent=31 // pred_check_branch
        %486 = sbr.rel (%p484) target = $region44
      $region43: #{kcbert_forward.2} parent=31 // pred_region
        %p487 = scmp.lt.s32.totalorder %s22, 1
        %s488 = scalar_select %p487, %s22, 1
        %s489 = smul.addr %s488, 4
        %s490 = smul.addr %s489, 8
        %s491 = scalar_lea.vmem %s6, %s490
      $region44: #{kcbert_forward.2} parent=31 // pred_fallthru
        _
      // Predicated region
      $region45: #{kcbert_forward.2} parent=31 // pred_check
        %p492 = pneg %p204
      $region46: #{kcbert_forward.2} parent=31 // pred_check_branch
        %494 = sbr.rel (%p492) target = $region48
      $region47: #{kcbert_forward.2} parent=31 // pred_region
        %p495 = scmp.lt.s32.totalorder %s22, 1
        %s496 = scalar_select %p495, %s22, 1
        %s497 = scalar_lea.vmem %s7, %s496
      $region48: #{kcbert_forward.2} parent=31 // pred_fallthru
        _
      // Predicated region
      $region49: #{kcbert_forward.2} parent=31 // pred_check
        %p498 = pneg %p230
      $region50: #{kcbert_forward.2} parent=31 // pred_check_branch
        %500 = sbr.rel (%p498) target = $region52
      $region51: #{kcbert_forward.2} parent=31 // pred_region
        %p501 = scmp.lt.s32.totalorder %s22, 1
        %s502 = scalar_select %p501, %s22, 1
        %s503 = scalar_lea.vmem %s8, %s502
      $region52: #{kcbert_forward.2} parent=31 // pred_fallthru
        _
      // Predicated region
      $region53: #{kcbert_forward.2} parent=31 // pred_check
        %p504 = pneg %p256
      $region54: #{kcbert_forward.2} parent=31 // pred_check_branch
        %506 = sbr.rel (%p504) target = $region56
      $region55: #{kcbert_forward.2} parent=31 // pred_region
        %p507 = scmp.lt.s32.totalorder %s22, 1
        %s508 = scalar_select %p507, %s22, 1
        %s509 = scalar_lea.vmem %s9, %s508
      $region56: #{kcbert_forward.2} parent=31 // pred_fallthru
        _
      // Predicated region
      $region57: #{kcbert_forward.2} parent=31 // pred_check
        %p510 = pneg %p282
      $region58: #{kcbert_forward.2} parent=31 // pred_check_branch
        %512 = sbr.rel (%p510) target = $region60
      $region59: #{kcbert_forward.2} parent=31 // pred_region
        %p513 = scmp.lt.s32.totalorder %s22, 1
        %s514 = scalar_select %p513, %s22, 1
        %s515 = smul.addr %s514, 4
        %s516 = smul.addr %s515, 8
        %s517 = scalar_lea.vmem %s10, %s516
      $region60: #{kcbert_forward.2} parent=31 // pred_fallthru
        _
      // Predicated region
      $region61: #{kcbert_forward.2} parent=31 // pred_check
        %p518 = pneg %p308
      $region62: #{kcbert_forward.2} parent=31 // pred_check_branch
        %520 = sbr.rel (%p518) target = $region64
      $region63: #{kcbert_forward.2} parent=31 // pred_region
        %p521 = scmp.lt.s32.totalorder %s22, 1
        %s522 = scalar_select %p521, %s22, 1
        %s523 = scalar_lea.vmem %s11, %s522
      $region64: #{kcbert_forward.2} parent=31 // pred_fallthru
        _
      // Predicated region
      $region65: #{kcbert_forward.2} parent=31 // pred_check
        %p524 = pneg %p334
      $region66: #{kcbert_forward.2} parent=31 // pred_check_branch
        %526 = sbr.rel (%p524) target = $region68
      $region67: #{kcbert_forward.2} parent=31 // pred_region
        %p527 = scmp.lt.s32.totalorder %s22, 1
        %s528 = scalar_select %p527, %s22, 1
        %s529 = smul.addr %s528, 8
        %s530 = smul.addr %s529, 8
        %s531 = scalar_lea.vmem %s12, %s530
      $region68: #{kcbert_forward.2} parent=31 // pred_fallthru
        _
      // Predicated region
      $region69: #{kcbert_forward.2} parent=31 // pred_check
        %p532 = pneg %p360
      $region70: #{kcbert_forward.2} parent=31 // pred_check_branch
        %534 = sbr.rel (%p532) target = $region72
      $region71: #{kcbert_forward.2} parent=31 // pred_region
        %p535 = scmp.lt.s32.totalorder %s22, 1
        %s536 = scalar_select %p535, %s22, 1
        %s537 = scalar_lea.vmem %s13, %s536
      $region72: #{kcbert_forward.2} parent=31 // pred_fallthru
        _
      // Predicated region
      $region73: #{kcbert_forward.2} parent=31 // pred_check
        %p538 = pneg %p386
      $region74: #{kcbert_forward.2} parent=31 // pred_check_branch
        %540 = sbr.rel (%p538) target = $region76
      $region75: #{kcbert_forward.2} parent=31 // pred_region
        %p541 = scmp.lt.s32.totalorder %s22, 1
        %s542 = scalar_select %p541, %s22, 1
        %s543 = scalar_lea.vmem %s14, %s542
      $region76: #{kcbert_forward.2} parent=31 // pred_fallthru
        _
      // Predicated region
      $region77: #{kcbert_forward.2} parent=31 // pred_check
        %p544 = pneg %p412
      $region78: #{kcbert_forward.2} parent=31 // pred_check_branch
        %546 = sbr.rel (%p544) target = $region80
      $region79: #{kcbert_forward.2} parent=31 // pred_region
        %p547 = scmp.lt.s32.totalorder %s22, 1
        %s548 = scalar_select %p547, %s22, 1
        %s549 = scalar_lea.vmem %s15, %s548
      $region80: #{kcbert_forward.2} parent=31 // pred_fallthru
        _
    $region32: #{kcbert_forward.2} parent=5 // pred_fallthru
      _
    %p550 = scmp.le.s32.totalorder 1, %s22
    %p551 = scmp.lt.s32.totalorder %s22, 3
    %p552 = pnand %p550, %p551
    %p553 = pneg %p552
    // Predicated region
    $region81: #{kcbert_forward.2} parent=5 // pred_check
      _
    $region82: #{kcbert_forward.2} parent=5 // pred_check_branch
      %555 = sbr.rel (%p552) target = $region84
    $region83: #{kcbert_forward.2} parent=5 // pred_region
      %s556 = ssub.s32 %s22, 1
      %p557 = pneg %p43
      %p558 = pneg %p40
      %p559 = pneg %p64
      %p560 = pneg %p61
      %p561 = pneg %p85
      %p562 = pneg %p82
      %p563 = pneg %p106
      %p564 = pneg %p103
      %p565 = scmp.lt.s32.totalorder %s27, 1
      %s566 = scalar_select %p565, %s27, 1
      %s567 = smul.addr %s566, 4
      %s568 = smul.addr %s567, 8
      %s569 = scalar_lea.vmem %s4, %s568
      %p570 = pneg %p132
      %p571 = pneg %p129
      %p572 = scmp.lt.s32.totalorder %s27, 1
      %s573 = scalar_select %p572, %s27, 1
      %s574 = scalar_lea.vmem %s5, %s573
      %p575 = pneg %p158
      %p576 = pneg %p155
      %p577 = scmp.lt.s32.totalorder %s27, 1
      %s578 = scalar_select %p577, %s27, 1
      %s579 = smul.addr %s578, 4
      %s580 = smul.addr %s579, 8
      %s581 = scalar_lea.vmem %s6, %s580
      %p582 = pneg %p184
      %p583 = pneg %p181
      %p584 = scmp.lt.s32.totalorder %s27, 1
      %s585 = scalar_select %p584, %s27, 1
      %s586 = scalar_lea.vmem %s7, %s585
      %p587 = pneg %p210
      %p588 = pneg %p207
      %p589 = scmp.lt.s32.totalorder %s27, 1
      %s590 = scalar_select %p589, %s27, 1
      %s591 = scalar_lea.vmem %s8, %s590
      %p592 = pneg %p236
      %p593 = pneg %p233
      %p594 = scmp.lt.s32.totalorder %s27, 1
      %s595 = scalar_select %p594, %s27, 1
      %s596 = scalar_lea.vmem %s9, %s595
      %p597 = pneg %p262
      %p598 = pneg %p259
      %p599 = scmp.lt.s32.totalorder %s27, 1
      %s600 = scalar_select %p599, %s27, 1
      %s601 = smul.addr %s600, 4
      %s602 = smul.addr %s601, 8
      %s603 = scalar_lea.vmem %s10, %s602
      %p604 = pneg %p288
      %p605 = pneg %p285
      %p606 = scmp.lt.s32.totalorder %s27, 1
      %s607 = scalar_select %p606, %s27, 1
      %s608 = scalar_lea.vmem %s11, %s607
      %p609 = pneg %p314
      %p610 = pneg %p311
      %p611 = scmp.lt.s32.totalorder %s27, 1
      %s612 = scalar_select %p611, %s27, 1
      %s613 = smul.addr %s612, 8
      %s614 = smul.addr %s613, 8
      %s615 = scalar_lea.vmem %s12, %s614
      %p616 = pneg %p340
      %p617 = pneg %p337
      %p618 = scmp.lt.s32.totalorder %s27, 1
      %s619 = scalar_select %p618, %s27, 1
      %s620 = scalar_lea.vmem %s13, %s619
      %p621 = pneg %p366
      %p622 = pneg %p363
      %p623 = scmp.lt.s32.totalorder %s27, 1
      %s624 = scalar_select %p623, %s27, 1
      %s625 = scalar_lea.vmem %s14, %s624
      %p626 = pneg %p392
      %p627 = pneg %p389
      %p628 = scmp.lt.s32.totalorder %s27, 1
      %s629 = scalar_select %p628, %s27, 1
      %s630 = scalar_lea.vmem %s15, %s629
      %p631 = pneg %p418
      %p632 = pneg %p415
      %p633 = pneg %p439
      %p634 = pneg %p436
      %p635 = scmp.lt.s32.totalorder %s27, 1
      %s636 = scalar_select %p635, %s27, 1
      %s637 = smul.addr %s636, 4
      %s638 = smul.addr %s637, 8
      %s639 = scalar_lea.vmem %s4, %s638
      %p640 = scmp.lt.s32.totalorder %s27, 1
      %s641 = scalar_select %p640, %s27, 1
      %s642 = scalar_lea.vmem %s5, %s641
      %p643 = scmp.lt.s32.totalorder %s27, 1
      %s644 = scalar_select %p643, %s27, 1
      %s645 = smul.addr %s644, 4
      %s646 = smul.addr %s645, 8
      %s647 = scalar_lea.vmem %s6, %s646
      %p648 = scmp.lt.s32.totalorder %s27, 1
      %s649 = scalar_select %p648, %s27, 1
      %s650 = scalar_lea.vmem %s7, %s649
      %p651 = scmp.lt.s32.totalorder %s27, 1
      %s652 = scalar_select %p651, %s27, 1
      %s653 = scalar_lea.vmem %s8, %s652
      %p654 = scmp.lt.s32.totalorder %s27, 1
      %s655 = scalar_select %p654, %s27, 1
      %s656 = scalar_lea.vmem %s9, %s655
      %p657 = scmp.lt.s32.totalorder %s27, 1
      %s658 = scalar_select %p657, %s27, 1
      %s659 = smul.addr %s658, 4
      %s660 = smul.addr %s659, 8
      %s661 = scalar_lea.vmem %s10, %s660
      %p662 = scmp.lt.s32.totalorder %s27, 1
      %s663 = scalar_select %p662, %s27, 1
      %s664 = scalar_lea.vmem %s11, %s663
      %p665 = scmp.lt.s32.totalorder %s27, 1
      %s666 = scalar_select %p665, %s27, 1
      %s667 = smul.addr %s666, 8
      %s668 = smul.addr %s667, 8
      %s669 = scalar_lea.vmem %s12, %s668
      %p670 = scmp.lt.s32.totalorder %s27, 1
      %s671 = scalar_select %p670, %s27, 1
      %s672 = scalar_lea.vmem %s13, %s671
      %p673 = scmp.lt.s32.totalorder %s27, 1
      %s674 = scalar_select %p673, %s27, 1
      %s675 = scalar_lea.vmem %s14, %s674
      %p676 = scmp.lt.s32.totalorder %s27, 1
      %s677 = scalar_select %p676, %s27, 1
      %s678 = scalar_lea.vmem %s15, %s677
      %p679 = scmp.eq.s32.totalorder %s27, 0
      // Predicated region
      $region85: #{kcbert_forward.2} parent=83 // pred_check
        %p680 = pneg %p679
      $region86: #{kcbert_forward.2} parent=83 // pred_check_branch
        %682 = sbr.rel (%p680) target = $region88
      $region87: #{kcbert_forward.2} parent=83 // pred_region
        %v683 = vld [vmem:[%s0] sm:$0xff]
        %v684 = vld [vmem:[%s0 + $0x8] sm:$0xff]
        %v685 = vld [vmem:[%s2] sm:$0x1]
        %v686 = vld [vmem:[%s3] sm:$0x1]
        %vm687 = vcmask 261120
        %v688 = vsel %vm687, %v683, 0.0
        %689 = vadd.xlane.f32.xlu0 %v688
        %v690 = vpop.xlane.xlu0 %689
        %v691 = vsel %vm687, %v684, 0.0
        %692 = vadd.xlane.f32.xlu0 %v691
        %v693 = vpop.xlane.xlu0 %692
        %v694 = vrcp.pop 32.0
        %v695 = vmul.f32 %v690, %v694
        %v696 = vmul.f32 %v693, %v694
        %v697 = vsub.f32 %v683, %v695
        %v698 = vsub.f32 %v684, %v696
        %v699 = vmul.f32 %v697, %v697
        %v700 = vmul.f32 %v698, %v698
        %v701 = vsel %vm687, %v699, 0.0
        %702 = vadd.xlane.f32.xlu0 %v701
        %v703 = vpop.xlane.xlu0 %702
        %v704 = vsel %vm687, %v700, 0.0
        %705 = vadd.xlane.f32.xlu0 %v704
        %v706 = vpop.xlane.xlu0 %705
        %v707 = vmul.f32 %v703, %v694
        %v708 = vmul.f32 %v706, %v694
        %v709 = vadd.f32 %v707, 1e-12
        %v710 = vadd.f32 %v708, 1e-12
        %v711 = vrsqrt.pop %v709
        %v712 = vrsqrt.pop %v710
        %v713 = vmul.f32 %v697, %v711
        %v714 = vmul.f32 %v698, %v712
        %v716 = vlaneseq
        %v717 = vshrl.u32 %v716, 7
        %v718 = vsub.s32 0, %v717
        %v719 = vrot.slane %v685, %v718
        %v721 = vmul.f32 %v713, %v719
        %v722 = vmul.f32 %v714, %v719
        %v724 = vlaneseq
        %v725 = vshrl.u32 %v724, 7
        %v726 = vsub.s32 0, %v725
        %v727 = vrot.slane %v686, %v726
        %v729 = vadd.f32 %v721, %v727
        %v730 = vadd.f32 %v722, %v727
        %731 = vst.msk [vmem:[%s16] sm:$0xff] %vm687, %v729
        %732 = vst.msk [vmem:[%s16 + $0x8] sm:$0xff] %vm687, %v730
      $region88: #{kcbert_forward.2} parent=83 // pred_fallthru
        _
      %v733 = vld [vmem:[%s16] sm:$0xff]
      %v734 = vld [vmem:[%s16 + $0x8] sm:$0xff]
      %v735 = vld [vmem:[%s639] sm:$0xff]
      %v736 = vld [vmem:[%s639 + $0x8] sm:$0xff]
      %v737 = vld [vmem:[%s639 + $0x10] sm:$0xff]
      %v738 = vld [vmem:[%s639 + $0x18] sm:$0xff]
      %v739 = vld [vmem:[%s642] sm:$0x1]
      %v741 = vlaneseq
      %v742 = vshrl.u32 %v741, 7
      %v743 = vsub.s32 0, %v742
      %v744 = vrot.slane %v739, %v743
      %vm746 = vcmask 261120
      %v748 = vsel %vm746, %v733, 0
      %v751 = vsel %vm746, %v734, 0
      %753 = vmatprep.subr.mxu0 0.0
      %754 = vmatpush1.msra.mxu0 %v735
      %755 = vmatprep.subr.mxu0 0.0
      %756 = vmatpush1.msra.mxu0 %v736
      %757 = vmatprep.subr.mxu0 0.0
      %758 = vmatpush1.msra.mxu0 %v737
      %759 = vmatprep.subr.mxu0 0.0
      %760 = vmatpush1.msra.mxu0 %v738
      %761 = vmatprep.subr.mxu0 0.0
      %762 = vmatpush1.msra.mxu0 0.0
      %763 = vmatprep.subr.mxu0 0.0
      %764 = vmatpush1.msra.mxu0 0.0
      %765 = vmatprep.subr.mxu0 0.0
      %766 = vmatpush1.msra.mxu0 0.0
      %767 = vmatprep.subr.mxu0 0.0
      %768 = vmatpush1.msra.mxu0 0.0
      %769 = vmatprep.subr.mxu0 0.0
      %770 = vmatpush1.msra.mxu0 0.0
      %771 = vmatprep.subr.mxu0 0.0
      %772 = vmatpush1.msra.mxu0 0.0
      %773 = vmatprep.subr.mxu0 0.0
      %774 = vmatpush1.msra.mxu0 0.0
      %775 = vmatprep.subr.mxu0 0.0
      %776 = vmatpush1.msra.mxu0 0.0
      %777 = vmatprep.subr.mxu0 0.0
      %778 = vmatpush1.msra.mxu0 0.0
      %779 = vmatprep.subr.mxu0 0.0
      %780 = vmatpush1.msra.mxu0 0.0
      %781 = vmatprep.subr.mxu0 0.0
      %782 = vmatpush1.msra.mxu0 0.0
      %783 = vmatprep.subr.mxu0 0.0
      %784 = vmatpush1.msra.mxu0 0.0
      %785 = vmatprep.subr.mxu0 0.0
      %786 = vmatpush1.msra.mxu0 0.0
      %787 = vmatprep.subr.mxu0 0.0
      %788 = vmatpush1.msra.mxu0 0.0
      %789 = vmatprep.subr.mxu0 0.0
      %790 = vmatpush1.msra.mxu0 0.0
      %791 = vmatprep.subr.mxu0 0.0
      %792 = vmatpush1.msra.mxu0 0.0
      %793 = vmatprep.subr.mxu0 0.0
      %794 = vmatpush1.msra.mxu0 0.0
      %795 = vmatprep.subr.mxu0 0.0
      %796 = vmatpush1.msra.mxu0 0.0
      %797 = vmatprep.subr.mxu0 0.0
      %798 = vmatpush1.msra.mxu0 0.0
      %799 = vmatprep.subr.mxu0 0.0
      %800 = vmatpush1.msra.mxu0 0.0
      %801 = vmatprep.subr.mxu0 0.0
      %802 = vmatpush1.msra.mxu0 0.0
      %803 = vmatprep.subr.mxu0 0.0
      %804 = vmatpush1.msra.mxu0 0.0
      %805 = vmatprep.subr.mxu0 0.0
      %806 = vmatpush1.msra.mxu0 0.0
      %807 = vmatprep.subr.mxu0 0.0
      %808 = vmatpush1.msra.mxu0 0.0
      %809 = vmatprep.subr.mxu0 0.0
      %810 = vmatpush1.msra.mxu0 0.0
      %811 = vmatprep.subr.mxu0 0.0
      %812 = vmatpush1.msra.mxu0 0.0
      %813 = vmatprep.subr.mxu0 0.0
      %814 = vmatpush1.msra.mxu0 0.0
      %815 = vmatprep.subr.mxu0 0.0
      %816 = vmatpush1.msra.mxu0 0.0
      %817 = vmatprep.mubr.f32.mxu0 0.0
      %818 = vmatmul.mubr.f32.gmra.mrb[0].mxu0 %v748
      %v819 = vpop.f32.mrb[0].mxu0
      %v820 = vadd.f32 %v744, %v819
      %v821 = vpop.f32.mrb[0].mxu0
      %822 = vmatprep.mubr.f32.mxu0 0.0
      %823 = vmatmul.mubr.f32.gmra.mrb[0].mxu0 %v751
      %v824 = vpop.f32.mrb[0].mxu0
      %v825 = vadd.f32 %v744, %v824
      %v826 = vpop.f32.mrb[0].mxu0
      %827 = vdwg.mxu0
      %v828 = vld [vmem:[%s1] sm:$0x1]
      %v829 = vld [vmem:[%s1 + $0x1] sm:$0x1]
      %v830 = vld [vmem:[%s650] sm:$0x1]
      %832 = vrot.lane.b32.xlu0 %v820, 96
      %v833 = vpop.permute.xlu0 %832
      %vm834 = vcmask 130048
      %v835 = vsel %vm834, %v820, 0
      %v837 = vsel %vm834, %v833, 0
      %839 = vmatprep.subr.mxu0 0.0
      %840 = vmatpush1.xpose.msra.mxu0 %v837
      %841 = vmatprep.subr.mxu0 0.0
      %842 = vmatpush1.xpose.msra.mxu0 0.0
      %843 = vmatprep.subr.mxu0 0.0
      %844 = vmatpush1.xpose.msra.mxu0 0.0
      %845 = vmatprep.subr.mxu0 0.0
      %846 = vmatpush1.xpose.msra.mxu0 0.0
      %847 = vmatprep.subr.mxu0 0.0
      %848 = vmatpush1.xpose.msra.mxu0 0.0
      %849 = vmatprep.subr.mxu0 0.0
      %850 = vmatpush1.xpose.msra.mxu0 0.0
      %851 = vmatprep.subr.mxu0 0.0
      %852 = vmatpush1.xpose.msra.mxu0 0.0
      %853 = vmatprep.subr.mxu0 0.0
      %854 = vmatpush1.xpose.msra.mxu0 0.0
      %855 = vmatprep.subr.mxu0 0.0
      %856 = vmatpush1.xpose.msra.mxu0 0.0
      %857 = vmatprep.subr.mxu0 0.0
      %858 = vmatpush1.xpose.msra.mxu0 0.0
      %859 = vmatprep.subr.mxu0 0.0
      %860 = vmatpush1.xpose.msra.mxu0 0.0
      %861 = vmatprep.subr.mxu0 0.0
      %862 = vmatpush1.xpose.msra.mxu0 0.0
      %863 = vmatprep.subr.mxu0 0.0
      %864 = vmatpush1.xpose.msra.mxu0 0.0
      %865 = vmatprep.subr.mxu0 0.0
      %866 = vmatpush1.xpose.msra.mxu0 0.0
      %867 = vmatprep.subr.mxu0 0.0
      %868 = vmatpush1.xpose.msra.mxu0 0.0
      %869 = vmatprep.subr.mxu0 0.0
      %870 = vmatpush1.xpose.msra.mxu0 0.0
      %871 = vmatprep.subr.mxu0 0.0
      %872 = vmatpush1.xpose.msra.mxu0 0.0
      %873 = vmatprep.subr.mxu0 0.0
      %874 = vmatpush1.xpose.msra.mxu0 0.0
      %875 = vmatprep.subr.mxu0 0.0
      %876 = vmatpush1.xpose.msra.mxu0 0.0
      %877 = vmatprep.subr.mxu0 0.0
      %878 = vmatpush1.xpose.msra.mxu0 0.0
      %879 = vmatprep.subr.mxu0 0.0
      %880 = vmatpush1.xpose.msra.mxu0 0.0
      %881 = vmatprep.subr.mxu0 0.0
      %882 = vmatpush1.xpose.msra.mxu0 0.0
      %883 = vmatprep.subr.mxu0 0.0
      %884 = vmatpush1.xpose.msra.mxu0 0.0
      %885 = vmatprep.subr.mxu0 0.0
      %886 = vmatpush1.xpose.msra.mxu0 0.0
      %887 = vmatprep.subr.mxu0 0.0
      %888 = vmatpush1.xpose.msra.mxu0 0.0
      %889 = vmatprep.subr.mxu0 0.0
      %890 = vmatpush1.xpose.msra.mxu0 0.0
      %891 = vmatprep.subr.mxu0 0.0
      %892 = vmatpush1.xpose.msra.mxu0 0.0
      %893 = vmatprep.subr.mxu0 0.0
      %894 = vmatpush1.xpose.msra.mxu0 0.0
      %895 = vmatprep.subr.mxu0 0.0
      %896 = vmatpush1.xpose.msra.mxu0 0.0
      %897 = vmatprep.subr.mxu0 0.0
      %898 = vmatpush1.xpose.msra.mxu0 0.0
      %899 = vmatprep.subr.mxu0 0.0
      %900 = vmatpush1.xpose.msra.mxu0 0.0
      %901 = vmatprep.subr.mxu0 0.0
      %902 = vmatpush1.xpose.msra.mxu0 0.0
      %903 = vmatprep.mubr.f32.mxu0 0.0
      %904 = vmatmul.mubr.f32.gmra.mrb[0].mxu0 %v835
      %v905 = vpop.f32.mrb[0].mxu0
      %v906 = vadd.f32 0.0, %v905
      %v907 = vpop.f32.mrb[0].mxu0
      %908 = vdwg.mxu0
      %910 = vrot.lane.b32.xlu0 %v825, 96
      %v911 = vpop.permute.xlu0 %910
      %v912 = vsel %vm834, %v825, 0
      %v914 = vsel %vm834, %v911, 0
      %916 = vmatprep.subr.mxu0 0.0
      %917 = vmatpush1.xpose.msra.mxu0 %v914
      %918 = vmatprep.subr.mxu0 0.0
      %919 = vmatpush1.xpose.msra.mxu0 0.0
      %920 = vmatprep.subr.mxu0 0.0
      %921 = vmatpush1.xpose.msra.mxu0 0.0
      %922 = vmatprep.subr.mxu0 0.0
      %923 = vmatpush1.xpose.msra.mxu0 0.0
      %924 = vmatprep.subr.mxu0 0.0
      %925 = vmatpush1.xpose.msra.mxu0 0.0
      %926 = vmatprep.subr.mxu0 0.0
      %927 = vmatpush1.xpose.msra.mxu0 0.0
      %928 = vmatprep.subr.mxu0 0.0
      %929 = vmatpush1.xpose.msra.mxu0 0.0
      %930 = vmatprep.subr.mxu0 0.0
      %931 = vmatpush1.xpose.msra.mxu0 0.0
      %932 = vmatprep.subr.mxu0 0.0
      %933 = vmatpush1.xpose.msra.mxu0 0.0
      %934 = vmatprep.subr.mxu0 0.0
      %935 = vmatpush1.xpose.msra.mxu0 0.0
      %936 = vmatprep.subr.mxu0 0.0
      %937 = vmatpush1.xpose.msra.mxu0 0.0
      %938 = vmatprep.subr.mxu0 0.0
      %939 = vmatpush1.xpose.msra.mxu0 0.0
      %940 = vmatprep.subr.mxu0 0.0
      %941 = vmatpush1.xpose.msra.mxu0 0.0
      %942 = vmatprep.subr.mxu0 0.0
      %943 = vmatpush1.xpose.msra.mxu0 0.0
      %944 = vmatprep.subr.mxu0 0.0
      %945 = vmatpush1.xpose.msra.mxu0 0.0
      %946 = vmatprep.subr.mxu0 0.0
      %947 = vmatpush1.xpose.msra.mxu0 0.0
      %948 = vmatprep.subr.mxu0 0.0
      %949 = vmatpush1.xpose.msra.mxu0 0.0
      %950 = vmatprep.subr.mxu0 0.0
      %951 = vmatpush1.xpose.msra.mxu0 0.0
      %952 = vmatprep.subr.mxu0 0.0
      %953 = vmatpush1.xpose.msra.mxu0 0.0
      %954 = vmatprep.subr.mxu0 0.0
      %955 = vmatpush1.xpose.msra.mxu0 0.0
      %956 = vmatprep.subr.mxu0 0.0
      %957 = vmatpush1.xpose.msra.mxu0 0.0
      %958 = vmatprep.subr.mxu0 0.0
      %959 = vmatpush1.xpose.msra.mxu0 0.0
      %960 = vmatprep.subr.mxu0 0.0
      %961 = vmatpush1.xpose.msra.mxu0 0.0
      %962 = vmatprep.subr.mxu0 0.0
      %963 = vmatpush1.xpose.msra.mxu0 0.0
      %964 = vmatprep.subr.mxu0 0.0
      %965 = vmatpush1.xpose.msra.mxu0 0.0
      %966 = vmatprep.subr.mxu0 0.0
      %967 = vmatpush1.xpose.msra.mxu0 0.0
      %968 = vmatprep.subr.mxu0 0.0
      %969 = vmatpush1.xpose.msra.mxu0 0.0
      %970 = vmatprep.subr.mxu0 0.0
      %971 = vmatpush1.xpose.msra.mxu0 0.0
      %972 = vmatprep.subr.mxu0 0.0
      %973 = vmatpush1.xpose.msra.mxu0 0.0
      %974 = vmatprep.subr.mxu0 0.0
      %975 = vmatpush1.xpose.msra.mxu0 0.0
      %976 = vmatprep.subr.mxu0 0.0
      %977 = vmatpush1.xpose.msra.mxu0 0.0
      %978 = vmatprep.subr.mxu0 0.0
      %979 = vmatpush1.xpose.msra.mxu0 0.0
      %980 = vmatprep.mubr.f32.mxu0 0.0
      %981 = vmatmul.mubr.f32.gmra.mrb[0].mxu0 %v912
      %v982 = vpop.f32.mrb[0].mxu0
      %v983 = vadd.f32 0.0, %v982
      %v984 = vpop.f32.mrb[0].mxu0
      %985 = vdwg.mxu0
      %v986 = vmul.f32 %v906, 0.25
      %v987 = vmul.f32 %v983, 0.25
      %v990 = vlaneseq
      %v991 = vshrl.u32 %v990, 7
      %v992 = vsub.s32 0, %v991
      %v993 = vrot.slane %v828, %v992
      %v994 = vlaneseq
      %v995 = vshrl.u32 %v994, 7
      %v996 = vsub.s32 0, %v995
      %v997 = vrot.slane %v829, %v996
      %v1000 = vadd.f32 %v986, %v993
      %v1001 = vadd.f32 %v987, %v997
      %vm1002 = vcmask 64512
      %v1003 = vsel %vm1002, %v1000, -inf
      %1004 = vmax.xlane.f32.xlu0 %v1003
      %v1005 = vpop.xlane.xlu0 %1004
      %v1006 = vsel %vm1002, %v1001, -inf
      %1007 = vmax.xlane.f32.xlu0 %v1006
      %v1008 = vpop.xlane.xlu0 %1007
      %v1009 = vsub.f32 %v1000, %v1005
      %v1010 = vsub.f32 %v1001, %v1008
      %v1011 = vmul.f32 %v1009, 1.442695
      %v1012 = vpow.pop %v1011
      %v1013 = vmul.f32 %v1010, 1.442695
      %v1014 = vpow.pop %v1013
      %v1015 = vsel %vm1002, %v1012, 0.0
      %1016 = vadd.xlane.f32.xlu0 %v1015
      %v1017 = vpop.xlane.xlu0 %1016
      %v1018 = vsel %vm1002, %v1014, 0.0
      %1019 = vadd.xlane.f32.xlu0 %v1018
      %v1020 = vpop.xlane.xlu0 %1019
      %v1021 = vrcp.pop %v1017
      %v1022 = vrcp.pop %v1020
      %v1023 = vmul.f32 %v1012, %v1021
      %v1024 = vmul.f32 %v1014, %v1022
      %1025 = vrot.lane.b32.xlu0 %v820, 64
      %v1026 = vpop.permute.xlu0 %1025
      %v1029 = vsel %vm1002, %v1023, 0
      %1031 = vmatprep.subr.mxu0 0.0
      %1032 = vmatpush1.msra.mxu0 %v1026
      %1033 = vmatprep.subr.mxu0 0.0
      %1034 = vmatpush1.msra.mxu0 0.0
      %1035 = vmatprep.subr.mxu0 0.0
      %1036 = vmatpush1.msra.mxu0 0.0
      %1037 = vmatprep.subr.mxu0 0.0
      %1038 = vmatpush1.msra.mxu0 0.0
      %1039 = vmatprep.subr.mxu0 0.0
      %1040 = vmatpush1.msra.mxu0 0.0
      %1041 = vmatprep.subr.mxu0 0.0
      %1042 = vmatpush1.msra.mxu0 0.0
      %1043 = vmatprep.subr.mxu0 0.0
      %1044 = vmatpush1.msra.mxu0 0.0
      %1045 = vmatprep.subr.mxu0 0.0
      %1046 = vmatpush1.msra.mxu0 0.0
      %1047 = vmatprep.subr.mxu0 0.0
      %1048 = vmatpush1.msra.mxu0 0.0
      %1049 = vmatprep.subr.mxu0 0.0
      %1050 = vmatpush1.msra.mxu0 0.0
      %1051 = vmatprep.subr.mxu0 0.0
      %1052 = vmatpush1.msra.mxu0 0.0
      %1053 = vmatprep.subr.mxu0 0.0
      %1054 = vmatpush1.msra.mxu0 0.0
      %1055 = vmatprep.subr.mxu0 0.0
      %1056 = vmatpush1.msra.mxu0 0.0
      %1057 = vmatprep.subr.mxu0 0.0
      %1058 = vmatpush1.msra.mxu0 0.0
      %1059 = vmatprep.subr.mxu0 0.0
      %1060 = vmatpush1.msra.mxu0 0.0
      %1061 = vmatprep.subr.mxu0 0.0
      %1062 = vmatpush1.msra.mxu0 0.0
      %1063 = vmatprep.subr.mxu0 0.0
      %1064 = vmatpush1.msra.mxu0 0.0
      %1065 = vmatprep.subr.mxu0 0.0
      %1066 = vmatpush1.msra.mxu0 0.0
      %1067 = vmatprep.subr.mxu0 0.0
      %1068 = vmatpush1.msra.mxu0 0.0
      %1069 = vmatprep.subr.mxu0 0.0
      %1070 = vmatpush1.msra.mxu0 0.0
      %1071 = vmatprep.subr.mxu0 0.0
      %1072 = vmatpush1.msra.mxu0 0.0
      %1073 = vmatprep.subr.mxu0 0.0
      %1074 = vmatpush1.msra.mxu0 0.0
      %1075 = vmatprep.subr.mxu0 0.0
      %1076 = vmatpush1.msra.mxu0 0.0
      %1077 = vmatprep.subr.mxu0 0.0
      %1078 = vmatpush1.msra.mxu0 0.0
      %1079 = vmatprep.subr.mxu0 0.0
      %1080 = vmatpush1.msra.mxu0 0.0
      %1081 = vmatprep.subr.mxu0 0.0
      %1082 = vmatpush1.msra.mxu0 0.0
      %1083 = vmatprep.subr.mxu0 0.0
      %1084 = vmatpush1.msra.mxu0 0.0
      %1085 = vmatprep.subr.mxu0 0.0
      %1086 = vmatpush1.msra.mxu0 0.0
      %1087 = vmatprep.subr.mxu0 0.0
      %1088 = vmatpush1.msra.mxu0 0.0
      %1089 = vmatprep.subr.mxu0 0.0
      %1090 = vmatpush1.msra.mxu0 0.0
      %1091 = vmatprep.subr.mxu0 0.0
      %1092 = vmatpush1.msra.mxu0 0.0
      %1093 = vmatprep.subr.mxu0 0.0
      %1094 = vmatpush1.msra.mxu0 0.0
      %1095 = vmatprep.mubr.f32.mxu0 0.0
      %1096 = vmatmul.mubr.f32.gmra.mrb[0].mxu0 %v1029
      %v1097 = vpop.f32.mrb[0].mxu0
      %v1098 = vadd.f32 0.0, %v1097
      %v1099 = vpop.f32.mrb[0].mxu0
      %1100 = vdwg.mxu0
      %1101 = vrot.lane.b32.xlu0 %v825, 64
      %v1102 = vpop.permute.xlu0 %1101
      %v1105 = vsel %vm1002, %v1024, 0
      %1107 = vmatprep.subr.mxu0 0.0
      %1108 = vmatpush1.msra.mxu0 %v1102
      %1109 = vmatprep.subr.mxu0 0.0
      %1110 = vmatpush1.msra.mxu0 0.0
      %1111 = vmatprep.subr.mxu0 0.0
      %1112 = vmatpush1.msra.mxu0 0.0
      %1113 = vmatprep.subr.mxu0 0.0
      %1114 = vmatpush1.msra.mxu0 0.0
      %1115 = vmatprep.subr.mxu0 0.0
      %1116 = vmatpush1.msra.mxu0 0.0
      %1117 = vmatprep.subr.mxu0 0.0
      %1118 = vmatpush1.msra.mxu0 0.0
      %1119 = vmatprep.subr.mxu0 0.0
      %1120 = vmatpush1.msra.mxu0 0.0
      %1121 = vmatprep.subr.mxu0 0.0
      %1122 = vmatpush1.msra.mxu0 0.0
      %1123 = vmatprep.subr.mxu0 0.0
      %1124 = vmatpush1.msra.mxu0 0.0
      %1125 = vmatprep.subr.mxu0 0.0
      %1126 = vmatpush1.msra.mxu0 0.0
      %1127 = vmatprep.subr.mxu0 0.0
      %1128 = vmatpush1.msra.mxu0 0.0
      %1129 = vmatprep.subr.mxu0 0.0
      %1130 = vmatpush1.msra.mxu0 0.0
      %1131 = vmatprep.subr.mxu0 0.0
      %1132 = vmatpush1.msra.mxu0 0.0
      %1133 = vmatprep.subr.mxu0 0.0
      %1134 = vmatpush1.msra.mxu0 0.0
      %1135 = vmatprep.subr.mxu0 0.0
      %1136 = vmatpush1.msra.mxu0 0.0
      %1137 = vmatprep.subr.mxu0 0.0
      %1138 = vmatpush1.msra.mxu0 0.0
      %1139 = vmatprep.subr.mxu0 0.0
      %1140 = vmatpush1.msra.mxu0 0.0
      %1141 = vmatprep.subr.mxu0 0.0
      %1142 = vmatpush1.msra.mxu0 0.0
      %1143 = vmatprep.subr.mxu0 0.0
      %1144 = vmatpush1.msra.mxu0 0.0
      %1145 = vmatprep.subr.mxu0 0.0
      %1146 = vmatpush1.msra.mxu0 0.0
      %1147 = vmatprep.subr.mxu0 0.0
      %1148 = vmatpush1.msra.mxu0 0.0
      %1149 = vmatprep.subr.mxu0 0.0
      %1150 = vmatpush1.msra.mxu0 0.0
      %1151 = vmatprep.subr.mxu0 0.0
      %1152 = vmatpush1.msra.mxu0 0.0
      %1153 = vmatprep.subr.mxu0 0.0
      %1154 = vmatpush1.msra.mxu0 0.0
      %1155 = vmatprep.subr.mxu0 0.0
      %1156 = vmatpush1.msra.mxu0 0.0
      %1157 = vmatprep.subr.mxu0 0.0
      %1158 = vmatpush1.msra.mxu0 0.0
      %1159 = vmatprep.subr.mxu0 0.0
      %1160 = vmatpush1.msra.mxu0 0.0
      %1161 = vmatprep.subr.mxu0 0.0
      %1162 = vmatpush1.msra.mxu0 0.0
      %1163 = vmatprep.subr.mxu0 0.0
      %1164 = vmatpush1.msra.mxu0 0.0
      %1165 = vmatprep.subr.mxu0 0.0
      %1166 = vmatpush1.msra.mxu0 0.0
      %1167 = vmatprep.subr.mxu0 0.0
      %1168 = vmatpush1.msra.mxu0 0.0
      %1169 = vmatprep.subr.mxu0 0.0
      %1170 = vmatpush1.msra.mxu0 0.0
      %1171 = vmatprep.mubr.f32.mxu0 0.0
      %1172 = vmatmul.mubr.f32.gmra.mrb[0].mxu0 %v1105
      %v1173 = vpop.f32.mrb[0].mxu0
      %v1174 = vadd.f32 0.0, %v1173
      %v1175 = vpop.f32.mrb[0].mxu0
      %1176 = vdwg.mxu0
      %v1177 = vld [vmem:[%s647] sm:$0xff]
      %v1178 = vld [vmem:[%s647 + $0x8] sm:$0xff]
      %v1180 = vsel %vm834, %v1098, 0
      %v1183 = vsel %vm834, %v1174, 0
      %1185 = vmatprep.subr.mxu0 0.0
      %1186 = vmatpush1.msra.mxu0 %v1177
      %1187 = vmatprep.subr.mxu0 0.0
      %1188 = vmatpush1.msra.mxu0 %v1178
      %1189 = vmatprep.subr.mxu0 0.0
      %1190 = vmatpush1.msra.mxu0 0.0
      %1191 = vmatprep.subr.mxu0 0.0
      %1192 = vmatpush1.msra.mxu0 0.0
      %1193 = vmatprep.subr.mxu0 0.0
      %1194 = vmatpush1.msra.mxu0 0.0
      %1195 = vmatprep.subr.mxu0 0.0
      %1196 = vmatpush1.msra.mxu0 0.0
      %1197 = vmatprep.subr.mxu0 0.0
      %1198 = vmatpush1.msra.mxu0 0.0
      %1199 = vmatprep.subr.mxu0 0.0
      %1200 = vmatpush1.msra.mxu0 0.0
      %1201 = vmatprep.subr.mxu0 0.0
      %1202 = vmatpush1.msra.mxu0 0.0
      %1203 = vmatprep.subr.mxu0 0.0
      %1204 = vmatpush1.msra.mxu0 0.0
      %1205 = vmatprep.subr.mxu0 0.0
      %1206 = vmatpush1.msra.mxu0 0.0
      %1207 = vmatprep.subr.mxu0 0.0
      %1208 = vmatpush1.msra.mxu0 0.0
      %1209 = vmatprep.subr.mxu0 0.0
      %1210 = vmatpush1.msra.mxu0 0.0
      %1211 = vmatprep.subr.mxu0 0.0
      %1212 = vmatpush1.msra.mxu0 0.0
      %1213 = vmatprep.subr.mxu0 0.0
      %1214 = vmatpush1.msra.mxu0 0.0
      %1215 = vmatprep.subr.mxu0 0.0
      %1216 = vmatpush1.msra.mxu0 0.0
      %1217 = vmatprep.subr.mxu0 0.0
      %1218 = vmatpush1.msra.mxu0 0.0
      %1219 = vmatprep.subr.mxu0 0.0
      %1220 = vmatpush1.msra.mxu0 0.0
      %1221 = vmatprep.subr.mxu0 0.0
      %1222 = vmatpush1.msra.mxu0 0.0
      %1223 = vmatprep.subr.mxu0 0.0
      %1224 = vmatpush1.msra.mxu0 0.0
      %1225 = vmatprep.subr.mxu0 0.0
      %1226 = vmatpush1.msra.mxu0 0.0
      %1227 = vmatprep.subr.mxu0 0.0
      %1228 = vmatpush1.msra.mxu0 0.0
      %1229 = vmatprep.subr.mxu0 0.0
      %1230 = vmatpush1.msra.mxu0 0.0
      %1231 = vmatprep.subr.mxu0 0.0
      %1232 = vmatpush1.msra.mxu0 0.0
      %1233 = vmatprep.subr.mxu0 0.0
      %1234 = vmatpush1.msra.mxu0 0.0
      %1235 = vmatprep.subr.mxu0 0.0
      %1236 = vmatpush1.msra.mxu0 0.0
      %1237 = vmatprep.subr.mxu0 0.0
      %1238 = vmatpush1.msra.mxu0 0.0
      %1239 = vmatprep.subr.mxu0 0.0
      %1240 = vmatpush1.msra.mxu0 0.0
      %1241 = vmatprep.subr.mxu0 0.0
      %1242 = vmatpush1.msra.mxu0 0.0
      %1243 = vmatprep.subr.mxu0 0.0
      %1244 = vmatpush1.msra.mxu0 0.0
      %1245 = vmatprep.subr.mxu0 0.0
      %1246 = vmatpush1.msra.mxu0 0.0
      %1247 = vmatprep.subr.mxu0 0.0
      %1248 = vmatpush1.msra.mxu0 0.0
      %1249 = vmatprep.mubr.f32.mxu0 0.0
      %1250 = vmatmul.mubr.f32.gmra.mrb[0].mxu0 %v1180
      %v1251 = vpop.f32.mrb[0].mxu0
      %v1252 = vadd.f32 0.0, %v1251
      %v1253 = vpop.f32.mrb[0].mxu0
      %1254 = vmatprep.mubr.f32.mxu0 0.0
      %1255 = vmatmul.mubr.f32.gmra.mrb[0].mxu0 %v1183
      %v1256 = vpop.f32.mrb[0].mxu0
      %v1257 = vadd.f32 0.0, %v1256
      %v1258 = vpop.f32.mrb[0].mxu0
      %1259 = vdwg.mxu0
      %v1261 = vlaneseq
      %v1262 = vshrl.u32 %v1261, 7
      %v1263 = vsub.s32 0, %v1262
      %v1264 = vrot.slane %v830, %v1263
      %v1266 = vadd.f32 %v1264, %v1252
      %v1267 = vadd.f32 %v1264, %v1257
      %1268 = vrot.lane.b32.xlu0 %v820, 112
      %v1269 = vpop.permute.xlu0 %1268
      %1270 = vrot.lane.b32.xlu0 %v820, 80
      %v1271 = vpop.permute.xlu0 %1270
      %v1272 = vsel %vm834, %v1269, 0
      %v1274 = vsel %vm834, %v1271, 0
      %1276 = vmatprep.subr.mxu0 0.0
      %1277 = vmatpush1.xpose.msra.mxu0 %v1274
      %1278 = vmatprep.subr.mxu0 0.0
      %1279 = vmatpush1.xpose.msra.mxu0 0.0
      %1280 = vmatprep.subr.mxu0 0.0
      %1281 = vmatpush1.xpose.msra.mxu0 0.0
      %1282 = vmatprep.subr.mxu0 0.0
      %1283 = vmatpush1.xpose.msra.mxu0 0.0
      %1284 = vmatprep.subr.mxu0 0.0
      %1285 = vmatpush1.xpose.msra.mxu0 0.0
      %1286 = vmatprep.subr.mxu0 0.0
      %1287 = vmatpush1.xpose.msra.mxu0 0.0
      %1288 = vmatprep.subr.mxu0 0.0
      %1289 = vmatpush1.xpose.msra.mxu0 0.0
      %1290 = vmatprep.subr.mxu0 0.0
      %1291 = vmatpush1.xpose.msra.mxu0 0.0
      %1292 = vmatprep.subr.mxu0 0.0
      %1293 = vmatpush1.xpose.msra.mxu0 0.0
      %1294 = vmatprep.subr.mxu0 0.0
      %1295 = vmatpush1.xpose.msra.mxu0 0.0
      %1296 = vmatprep.subr.mxu0 0.0
      %1297 = vmatpush1.xpose.msra.mxu0 0.0
      %1298 = vmatprep.subr.mxu0 0.0
      %1299 = vmatpush1.xpose.msra.mxu0 0.0
      %1300 = vmatprep.subr.mxu0 0.0
      %1301 = vmatpush1.xpose.msra.mxu0 0.0
      %1302 = vmatprep.subr.mxu0 0.0
      %1303 = vmatpush1.xpose.msra.mxu0 0.0
      %1304 = vmatprep.subr.mxu0 0.0
      %1305 = vmatpush1.xpose.msra.mxu0 0.0
      %1306 = vmatprep.subr.mxu0 0.0
      %1307 = vmatpush1.xpose.msra.mxu0 0.0
      %1308 = vmatprep.subr.mxu0 0.0
      %1309 = vmatpush1.xpose.msra.mxu0 0.0
      %1310 = vmatprep.subr.mxu0 0.0
      %1311 = vmatpush1.xpose.msra.mxu0 0.0
      %1312 = vmatprep.subr.mxu0 0.0
      %1313 = vmatpush1.xpose.msra.mxu0 0.0
      %1314 = vmatprep.subr.mxu0 0.0
      %1315 = vmatpush1.xpose.msra.mxu0 0.0
      %1316 = vmatprep.subr.mxu0 0.0
      %1317 = vmatpush1.xpose.msra.mxu0 0.0
      %1318 = vmatprep.subr.mxu0 0.0
      %1319 = vmatpush1.xpose.msra.mxu0 0.0
      %1320 = vmatprep.subr.mxu0 0.0
      %1321 = vmatpush1.xpose.msra.mxu0 0.0
      %1322 = vmatprep.subr.mxu0 0.0
      %1323 = vmatpush1.xpose.msra.mxu0 0.0
      %1324 = vmatprep.subr.mxu0 0.0
      %1325 = vmatpush1.xpose.msra.mxu0 0.0
      %1326 = vmatprep.subr.mxu0 0.0
      %1327 = vmatpush1.xpose.msra.mxu0 0.0
      %1328 = vmatprep.subr.mxu0 0.0
      %1329 = vmatpush1.xpose.msra.mxu0 0.0
      %1330 = vmatprep.subr.mxu0 0.0
      %1331 = vmatpush1.xpose.msra.mxu0 0.0
      %1332 = vmatprep.subr.mxu0 0.0
      %1333 = vmatpush1.xpose.msra.mxu0 0.0
      %1334 = vmatprep.subr.mxu0 0.0
      %1335 = vmatpush1.xpose.msra.mxu0 0.0
      %1336 = vmatprep.subr.mxu0 0.0
      %1337 = vmatpush1.xpose.msra.mxu0 0.0
      %1338 = vmatprep.subr.mxu0 0.0
      %1339 = vmatpush1.xpose.msra.mxu0 0.0
      %1340 = vmatprep.mubr.f32.mxu0 0.0
      %1341 = vmatmul.mubr.f32.gmra.mrb[0].mxu0 %v1272
      %v1342 = vpop.f32.mrb[0].mxu0
      %v1343 = vadd.f32 0.0, %v1342
      %v1344 = vpop.f32.mrb[0].mxu0
      %1345 = vdwg.mxu0
      %1346 = vrot.lane.b32.xlu0 %v825, 112
      %v1347 = vpop.permute.xlu0 %1346
      %1348 = vrot.lane.b32.xlu0 %v825, 80
      %v1349 = vpop.permute.xlu0 %1348
      %v1350 = vsel %vm834, %v1347, 0
      %v1352 = vsel %vm834, %v1349, 0
      %1354 = vmatprep.subr.mxu0 0.0
      %1355 = vmatpush1.xpose.msra.mxu0 %v1352
      %1356 = vmatprep.subr.mxu0 0.0
      %1357 = vmatpush1.xpose.msra.mxu0 0.0
      %1358 = vmatprep.subr.mxu0 0.0
      %1359 = vmatpush1.xpose.msra.mxu0 0.0
      %1360 = vmatprep.subr.mxu0 0.0
      %1361 = vmatpush1.xpose.msra.mxu0 0.0
      %1362 = vmatprep.subr.mxu0 0.0
      %1363 = vmatpush1.xpose.msra.mxu0 0.0
      %1364 = vmatprep.subr.mxu0 0.0
      %1365 = vmatpush1.xpose.msra.mxu0 0.0
      %1366 = vmatprep.subr.mxu0 0.0
      %1367 = vmatpush1.xpose.msra.mxu0 0.0
      %1368 = vmatprep.subr.mxu0 0.0
      %1369 = vmatpush1.xpose.msra.mxu0 0.0
      %1370 = vmatprep.subr.mxu0 0.0
      %1371 = vmatpush1.xpose.msra.mxu0 0.0
      %1372 = vmatprep.subr.mxu0 0.0
      %1373 = vmatpush1.xpose.msra.mxu0 0.0
      %1374 = vmatprep.subr.mxu0 0.0
      %1375 = vmatpush1.xpose.msra.mxu0 0.0
      %1376 = vmatprep.subr.mxu0 0.0
      %1377 = vmatpush1.xpose.msra.mxu0 0.0
      %1378 = vmatprep.subr.mxu0 0.0
      %1379 = vmatpush1.xpose.msra.mxu0 0.0
      %1380 = vmatprep.subr.mxu0 0.0
      %1381 = vmatpush1.xpose.msra.mxu0 0.0
      %1382 = vmatprep.subr.mxu0 0.0
      %1383 = vmatpush1.xpose.msra.mxu0 0.0
      %1384 = vmatprep.subr.mxu0 0.0
      %1385 = vmatpush1.xpose.msra.mxu0 0.0
      %1386 = vmatprep.subr.mxu0 0.0
      %1387 = vmatpush1.xpose.msra.mxu0 0.0
      %1388 = vmatprep.subr.mxu0 0.0
      %1389 = vmatpush1.xpose.msra.mxu0 0.0
      %1390 = vmatprep.subr.mxu0 0.0
      %1391 = vmatpush1.xpose.msra.mxu0 0.0
      %1392 = vmatprep.subr.mxu0 0.0
      %1393 = vmatpush1.xpose.msra.mxu0 0.0
      %1394 = vmatprep.subr.mxu0 0.0
      %1395 = vmatpush1.xpose.msra.mxu0 0.0
      %1396 = vmatprep.subr.mxu0 0.0
      %1397 = vmatpush1.xpose.msra.mxu0 0.0
      %1398 = vmatprep.subr.mxu0 0.0
      %1399 = vmatpush1.xpose.msra.mxu0 0.0
      %1400 = vmatprep.subr.mxu0 0.0
      %1401 = vmatpush1.xpose.msra.mxu0 0.0
      %1402 = vmatprep.subr.mxu0 0.0
      %1403 = vmatpush1.xpose.msra.mxu0 0.0
      %1404 = vmatprep.subr.mxu0 0.0
      %1405 = vmatpush1.xpose.msra.mxu0 0.0
      %1406 = vmatprep.subr.mxu0 0.0
      %1407 = vmatpush1.xpose.msra.mxu0 0.0
      %1408 = vmatprep.subr.mxu0 0.0
      %1409 = vmatpush1.xpose.msra.mxu0 0.0
      %1410 = vmatprep.subr.mxu0 0.0
      %1411 = vmatpush1.xpose.msra.mxu0 0.0
      %1412 = vmatprep.subr.mxu0 0.0
      %1413 = vmatpush1.xpose.msra.mxu0 0.0
      %1414 = vmatprep.subr.mxu0 0.0
      %1415 = vmatpush1.xpose.msra.mxu0 0.0
      %1416 = vmatprep.subr.mxu0 0.0
      %1417 = vmatpush1.xpose.msra.mxu0 0.0
      %1418 = vmatprep.mubr.f32.mxu0 0.0
      %1419 = vmatmul.mubr.f32.gmra.mrb[0].mxu0 %v1350
      %v1420 = vpop.f32.mrb[0].mxu0
      %v1421 = vadd.f32 0.0, %v1420
      %v1422 = vpop.f32.mrb[0].mxu0
      %1423 = vdwg.mxu0
      %v1424 = vmul.f32 %v1343, 0.25
      %v1425 = vmul.f32 %v1421, 0.25
      %v1426 = vadd.f32 %v1424, %v993
      %v1427 = vadd.f32 %v1425, %v997
      %v1428 = vsel %vm1002, %v1426, -inf
      %1429 = vmax.xlane.f32.xlu0 %v1428
      %v1430 = vpop.xlane.xlu0 %1429
      %v1431 = vsel %vm1002, %v1427, -inf
      %1432 = vmax.xlane.f32.xlu0 %v1431
      %v1433 = vpop.xlane.xlu0 %1432
      %v1434 = vsub.f32 %v1426, %v1430
      %v1435 = vsub.f32 %v1427, %v1433
      %v1436 = vmul.f32 %v1434, 1.442695
      %v1437 = vpow.pop %v1436
      %v1438 = vmul.f32 %v1435, 1.442695
      %v1439 = vpow.pop %v1438
      %v1440 = vsel %vm1002, %v1437, 0.0
      %1441 = vadd.xlane.f32.xlu0 %v1440
      %v1442 = vpop.xlane.xlu0 %1441
      %v1443 = vsel %vm1002, %v1439, 0.0
      %1444 = vadd.xlane.f32.xlu0 %v1443
      %v1445 = vpop.xlane.xlu0 %1444
      %v1446 = vrcp.pop %v1442
      %v1447 = vrcp.pop %v1445
      %v1448 = vmul.f32 %v1437, %v1446
      %v1449 = vmul.f32 %v1439, %v1447
      %1450 = vrot.lane.b32.xlu0 %v820, 48
      %v1451 = vpop.permute.xlu0 %1450
      %v1454 = vsel %vm1002, %v1448, 0
      %1456 = vmatprep.subr.mxu0 0.0
      %1457 = vmatpush1.msra.mxu0 %v1451
      %1458 = vmatprep.subr.mxu0 0.0
      %1459 = vmatpush1.msra.mxu0 0.0
      %1460 = vmatprep.subr.mxu0 0.0
      %1461 = vmatpush1.msra.mxu0 0.0
      %1462 = vmatprep.subr.mxu0 0.0
      %1463 = vmatpush1.msra.mxu0 0.0
      %1464 = vmatprep.subr.mxu0 0.0
      %1465 = vmatpush1.msra.mxu0 0.0
      %1466 = vmatprep.subr.mxu0 0.0
      %1467 = vmatpush1.msra.mxu0 0.0
      %1468 = vmatprep.subr.mxu0 0.0
      %1469 = vmatpush1.msra.mxu0 0.0
      %1470 = vmatprep.subr.mxu0 0.0
      %1471 = vmatpush1.msra.mxu0 0.0
      %1472 = vmatprep.subr.mxu0 0.0
      %1473 = vmatpush1.msra.mxu0 0.0
      %1474 = vmatprep.subr.mxu0 0.0
      %1475 = vmatpush1.msra.mxu0 0.0
      %1476 = vmatprep.subr.mxu0 0.0
      %1477 = vmatpush1.msra.mxu0 0.0
      %1478 = vmatprep.subr.mxu0 0.0
      %1479 = vmatpush1.msra.mxu0 0.0
      %1480 = vmatprep.subr.mxu0 0.0
      %1481 = vmatpush1.msra.mxu0 0.0
      %1482 = vmatprep.subr.mxu0 0.0
      %1483 = vmatpush1.msra.mxu0 0.0
      %1484 = vmatprep.subr.mxu0 0.0
      %1485 = vmatpush1.msra.mxu0 0.0
      %1486 = vmatprep.subr.mxu0 0.0
      %1487 = vmatpush1.msra.mxu0 0.0
      %1488 = vmatprep.subr.mxu0 0.0
      %1489 = vmatpush1.msra.mxu0 0.0
      %1490 = vmatprep.subr.mxu0 0.0
      %1491 = vmatpush1.msra.mxu0 0.0
      %1492 = vmatprep.subr.mxu0 0.0
      %1493 = vmatpush1.msra.mxu0 0.0
      %1494 = vmatprep.subr.mxu0 0.0
      %1495 = vmatpush1.msra.mxu0 0.0
      %1496 = vmatprep.subr.mxu0 0.0
      %1497 = vmatpush1.msra.mxu0 0.0
      %1498 = vmatprep.subr.mxu0 0.0
      %1499 = vmatpush1.msra.mxu0 0.0
      %1500 = vmatprep.subr.mxu0 0.0
      %1501 = vmatpush1.msra.mxu0 0.0
      %1502 = vmatprep.subr.mxu0 0.0
      %1503 = vmatpush1.msra.mxu0 0.0
      %1504 = vmatprep.subr.mxu0 0.0
      %1505 = vmatpush1.msra.mxu0 0.0
      %1506 = vmatprep.subr.mxu0 0.0
      %1507 = vmatpush1.msra.mxu0 0.0
      %1508 = vmatprep.subr.mxu0 0.0
      %1509 = vmatpush1.msra.mxu0 0.0
      %1510 = vmatprep.subr.mxu0 0.0
      %1511 = vmatpush1.msra.mxu0 0.0
      %1512 = vmatprep.subr.mxu0 0.0
      %1513 = vmatpush1.msra.mxu0 0.0
      %1514 = vmatprep.subr.mxu0 0.0
      %1515 = vmatpush1.msra.mxu0 0.0
      %1516 = vmatprep.subr.mxu0 0.0
      %1517 = vmatpush1.msra.mxu0 0.0
      %1518 = vmatprep.subr.mxu0 0.0
      %1519 = vmatpush1.msra.mxu0 0.0
      %1520 = vmatprep.mubr.f32.mxu0 0.0
      %1521 = vmatmul.mubr.f32.gmra.mrb[0].mxu0 %v1454
      %v1522 = vpop.f32.mrb[0].mxu0
      %v1523 = vadd.f32 0.0, %v1522
      %v1524 = vpop.f32.mrb[0].mxu0
      %1525 = vdwg.mxu0
      %1526 = vrot.lane.b32.xlu0 %v825, 48
      %v1527 = vpop.permute.xlu0 %1526
      %v1530 = vsel %vm1002, %v1449, 0
      %1532 = vmatprep.subr.mxu0 0.0
      %1533 = vmatpush1.msra.mxu0 %v1527
      %1534 = vmatprep.subr.mxu0 0.0
      %1535 = vmatpush1.msra.mxu0 0.0
      %1536 = vmatprep.subr.mxu0 0.0
      %1537 = vmatpush1.msra.mxu0 0.0
      %1538 = vmatprep.subr.mxu0 0.0
      %1539 = vmatpush1.msra.mxu0 0.0
      %1540 = vmatprep.subr.mxu0 0.0
      %1541 = vmatpush1.msra.mxu0 0.0
      %1542 = vmatprep.subr.mxu0 0.0
      %1543 = vmatpush1.msra.mxu0 0.0
      %1544 = vmatprep.subr.mxu0 0.0
      %1545 = vmatpush1.msra.mxu0 0.0
      %1546 = vmatprep.subr.mxu0 0.0
      %1547 = vmatpush1.msra.mxu0 0.0
      %1548 = vmatprep.subr.mxu0 0.0
      %1549 = vmatpush1.msra.mxu0 0.0
      %1550 = vmatprep.subr.mxu0 0.0
      %1551 = vmatpush1.msra.mxu0 0.0
      %1552 = vmatprep.subr.mxu0 0.0
      %1553 = vmatpush1.msra.mxu0 0.0
      %1554 = vmatprep.subr.mxu0 0.0
      %1555 = vmatpush1.msra.mxu0 0.0
      %1556 = vmatprep.subr.mxu0 0.0
      %1557 = vmatpush1.msra.mxu0 0.0
      %1558 = vmatprep.subr.mxu0 0.0
      %1559 = vmatpush1.msra.mxu0 0.0
      %1560 = vmatprep.subr.mxu0 0.0
      %1561 = vmatpush1.msra.mxu0 0.0
      %1562 = vmatprep.subr.mxu0 0.0
      %1563 = vmatpush1.msra.mxu0 0.0
      %1564 = vmatprep.subr.mxu0 0.0
      %1565 = vmatpush1.msra.mxu0 0.0
      %1566 = vmatprep.subr.mxu0 0.0
      %1567 = vmatpush1.msra.mxu0 0.0
      %1568 = vmatprep.subr.mxu0 0.0
      %1569 = vmatpush1.msra.mxu0 0.0
      %1570 = vmatprep.subr.mxu0 0.0
      %1571 = vmatpush1.msra.mxu0 0.0
      %1572 = vmatprep.subr.mxu0 0.0
      %1573 = vmatpush1.msra.mxu0 0.0
      %1574 = vmatprep.subr.mxu0 0.0
      %1575 = vmatpush1.msra.mxu0 0.0
      %1576 = vmatprep.subr.mxu0 0.0
      %1577 = vmatpush1.msra.mxu0 0.0
      %1578 = vmatprep.subr.mxu0 0.0
      %1579 = vmatpush1.msra.mxu0 0.0
      %1580 = vmatprep.subr.mxu0 0.0
      %1581 = vmatpush1.msra.mxu0 0.0
      %1582 = vmatprep.subr.mxu0 0.0
      %1583 = vmatpush1.msra.mxu0 0.0
      %1584 = vmatprep.subr.mxu0 0.0
      %1585 = vmatpush1.msra.mxu0 0.0
      %1586 = vmatprep.subr.mxu0 0.0
      %1587 = vmatpush1.msra.mxu0 0.0
      %1588 = vmatprep.subr.mxu0 0.0
      %1589 = vmatpush1.msra.mxu0 0.0
      %1590 = vmatprep.subr.mxu0 0.0
      %1591 = vmatpush1.msra.mxu0 0.0
      %1592 = vmatprep.subr.mxu0 0.0
      %1593 = vmatpush1.msra.mxu0 0.0
      %1594 = vmatprep.subr.mxu0 0.0
      %1595 = vmatpush1.msra.mxu0 0.0
      %1596 = vmatprep.mubr.f32.mxu0 0.0
      %1597 = vmatmul.mubr.f32.gmra.mrb[0].mxu0 %v1530
      %v1598 = vpop.f32.mrb[0].mxu0
      %v1599 = vadd.f32 0.0, %v1598
      %v1600 = vpop.f32.mrb[0].mxu0
      %1601 = vdwg.mxu0
      %v1602 = vld [vmem:[%s647 + $0x10] sm:$0xff]
      %v1603 = vld [vmem:[%s647 + $0x18] sm:$0xff]
      %v1605 = vsel %vm834, %v1523, 0
      %v1608 = vsel %vm834, %v1599, 0
      %1610 = vmatprep.subr.mxu0 0.0
      %1611 = vmatpush1.msra.mxu0 %v1602
      %1612 = vmatprep.subr.mxu0 0.0
      %1613 = vmatpush1.msra.mxu0 %v1603
      %1614 = vmatprep.subr.mxu0 0.0
      %1615 = vmatpush1.msra.mxu0 0.0
      %1616 = vmatprep.subr.mxu0 0.0
      %1617 = vmatpush1.msra.mxu0 0.0
      %1618 = vmatprep.subr.mxu0 0.0
      %1619 = vmatpush1.msra.mxu0 0.0
      %1620 = vmatprep.subr.mxu0 0.0
      %1621 = vmatpush1.msra.mxu0 0.0
      %1622 = vmatprep.subr.mxu0 0.0
      %1623 = vmatpush1.msra.mxu0 0.0
      %1624 = vmatprep.subr.mxu0 0.0
      %1625 = vmatpush1.msra.mxu0 0.0
      %1626 = vmatprep.subr.mxu0 0.0
      %1627 = vmatpush1.msra.mxu0 0.0
      %1628 = vmatprep.subr.mxu0 0.0
      %1629 = vmatpush1.msra.mxu0 0.0
      %1630 = vmatprep.subr.mxu0 0.0
      %1631 = vmatpush1.msra.mxu0 0.0
      %1632 = vmatprep.subr.mxu0 0.0
      %1633 = vmatpush1.msra.mxu0 0.0
      %1634 = vmatprep.subr.mxu0 0.0
      %1635 = vmatpush1.msra.mxu0 0.0
      %1636 = vmatprep.subr.mxu0 0.0
      %1637 = vmatpush1.msra.mxu0 0.0
      %1638 = vmatprep.subr.mxu0 0.0
      %1639 = vmatpush1.msra.mxu0 0.0
      %1640 = vmatprep.subr.mxu0 0.0
      %1641 = vmatpush1.msra.mxu0 0.0
      %1642 = vmatprep.subr.mxu0 0.0
      %1643 = vmatpush1.msra.mxu0 0.0
      %1644 = vmatprep.subr.mxu0 0.0
      %1645 = vmatpush1.msra.mxu0 0.0
      %1646 = vmatprep.subr.mxu0 0.0
      %1647 = vmatpush1.msra.mxu0 0.0
      %1648 = vmatprep.subr.mxu0 0.0
      %1649 = vmatpush1.msra.mxu0 0.0
      %1650 = vmatprep.subr.mxu0 0.0
      %1651 = vmatpush1.msra.mxu0 0.0
      %1652 = vmatprep.subr.mxu0 0.0
      %1653 = vmatpush1.msra.mxu0 0.0
      %1654 = vmatprep.subr.mxu0 0.0
      %1655 = vmatpush1.msra.mxu0 0.0
      %1656 = vmatprep.subr.mxu0 0.0
      %1657 = vmatpush1.msra.mxu0 0.0
      %1658 = vmatprep.subr.mxu0 0.0
      %1659 = vmatpush1.msra.mxu0 0.0
      %1660 = vmatprep.subr.mxu0 0.0
      %1661 = vmatpush1.msra.mxu0 0.0
      %1662 = vmatprep.subr.mxu0 0.0
      %1663 = vmatpush1.msra.mxu0 0.0
      %1664 = vmatprep.subr.mxu0 0.0
      %1665 = vmatpush1.msra.mxu0 0.0
      %1666 = vmatprep.subr.mxu0 0.0
      %1667 = vmatpush1.msra.mxu0 0.0
      %1668 = vmatprep.subr.mxu0 0.0
      %1669 = vmatpush1.msra.mxu0 0.0
      %1670 = vmatprep.subr.mxu0 0.0
      %1671 = vmatpush1.msra.mxu0 0.0
      %1672 = vmatprep.subr.mxu0 0.0
      %1673 = vmatpush1.msra.mxu0 0.0
      %1674 = vmatprep.mubr.f32.mxu0 0.0
      %1675 = vmatmul.mubr.f32.gmra.mrb[0].mxu0 %v1605
      %v1676 = vpop.f32.mrb[0].mxu0
      %v1677 = vadd.f32 0.0, %v1676
      %v1678 = vpop.f32.mrb[0].mxu0
      %1679 = vmatprep.mubr.f32.mxu0 0.0
      %1680 = vmatmul.mubr.f32.gmra.mrb[0].mxu0 %v1608
      %v1681 = vpop.f32.mrb[0].mxu0
      %v1682 = vadd.f32 0.0, %v1681
      %v1683 = vpop.f32.mrb[0].mxu0
      %1684 = vdwg.mxu0
      %v1685 = vadd.f32 %v1266, %v1677
      %v1686 = vadd.f32 %v1267, %v1682
      %v1687 = vadd.f32 %v733, %v1685
      %v1688 = vadd.f32 %v734, %v1686
      %v1689 = vld [vmem:[%s653] sm:$0x1]
      %v1690 = vld [vmem:[%s656] sm:$0x1]
      %v1691 = vsel %vm746, %v1687, 0.0
      %1692 = vadd.xlane.f32.xlu0 %v1691
      %v1693 = vpop.xlane.xlu0 %1692
      %v1694 = vsel %vm746, %v1688, 0.0
      %1695 = vadd.xlane.f32.xlu0 %v1694
      %v1696 = vpop.xlane.xlu0 %1695
      %v1697 = vrcp.pop 32.0
      %v1698 = vmul.f32 %v1693, %v1697
      %v1699 = vmul.f32 %v1696, %v1697
      %v1700 = vsub.f32 %v1687, %v1698
      %v1701 = vsub.f32 %v1688, %v1699
      %v1702 = vmul.f32 %v1700, %v1700
      %v1703 = vmul.f32 %v1701, %v1701
      %v1704 = vsel %vm746, %v1702, 0.0
      %1705 = vadd.xlane.f32.xlu0 %v1704
      %v1706 = vpop.xlane.xlu0 %1705
      %v1707 = vsel %vm746, %v1703, 0.0
      %1708 = vadd.xlane.f32.xlu0 %v1707
      %v1709 = vpop.xlane.xlu0 %1708
      %v1710 = vmul.f32 %v1706, %v1697
      %v1711 = vmul.f32 %v1709, %v1697
      %v1712 = vadd.f32 %v1710, 1e-12
      %v1713 = vadd.f32 %v1711, 1e-12
      %v1714 = vrsqrt.pop %v1712
      %v1715 = vrsqrt.pop %v1713
      %v1716 = vmul.f32 %v1700, %v1714
      %v1717 = vmul.f32 %v1701, %v1715
      %v1719 = vlaneseq
      %v1720 = vshrl.u32 %v1719, 7
      %v1721 = vsub.s32 0, %v1720
      %v1722 = vrot.slane %v1689, %v1721
      %v1724 = vmul.f32 %v1716, %v1722
      %v1725 = vmul.f32 %v1717, %v1722
      %v1727 = vlaneseq
      %v1728 = vshrl.u32 %v1727, 7
      %v1729 = vsub.s32 0, %v1728
      %v1730 = vrot.slane %v1690, %v1729
      %v1732 = vadd.f32 %v1724, %v1730
      %v1733 = vadd.f32 %v1725, %v1730
      %v1734 = vld [vmem:[%s661] sm:$0xff]
      %v1735 = vld [vmem:[%s661 + $0x8] sm:$0xff]
      %v1736 = vld [vmem:[%s661 + $0x10] sm:$0xff]
      %v1737 = vld [vmem:[%s661 + $0x18] sm:$0xff]
      %v1738 = vld [vmem:[%s664] sm:$0x1]
      %v1740 = vlaneseq
      %v1741 = vshrl.u32 %v1740, 7
      %v1742 = vsub.s32 0, %v1741
      %v1743 = vrot.slane %v1738, %v1742
      %v1746 = vsel %vm746, %v1732, 0
      %v1749 = vsel %vm746, %v1733, 0
      %1751 = vmatprep.subr.mxu0 0.0
      %1752 = vmatpush1.msra.mxu0 %v1734
      %1753 = vmatprep.subr.mxu0 0.0
      %1754 = vmatpush1.msra.mxu0 %v1735
      %1755 = vmatprep.subr.mxu0 0.0
      %1756 = vmatpush1.msra.mxu0 %v1736
      %1757 = vmatprep.subr.mxu0 0.0
      %1758 = vmatpush1.msra.mxu0 %v1737
      %1759 = vmatprep.subr.mxu0 0.0
      %1760 = vmatpush1.msra.mxu0 0.0
      %1761 = vmatprep.subr.mxu0 0.0
      %1762 = vmatpush1.msra.mxu0 0.0
      %1763 = vmatprep.subr.mxu0 0.0
      %1764 = vmatpush1.msra.mxu0 0.0
      %1765 = vmatprep.subr.mxu0 0.0
      %1766 = vmatpush1.msra.mxu0 0.0
      %1767 = vmatprep.subr.mxu0 0.0
      %1768 = vmatpush1.msra.mxu0 0.0
      %1769 = vmatprep.subr.mxu0 0.0
      %1770 = vmatpush1.msra.mxu0 0.0
      %1771 = vmatprep.subr.mxu0 0.0
      %1772 = vmatpush1.msra.mxu0 0.0
      %1773 = vmatprep.subr.mxu0 0.0
      %1774 = vmatpush1.msra.mxu0 0.0
      %1775 = vmatprep.subr.mxu0 0.0
      %1776 = vmatpush1.msra.mxu0 0.0
      %1777 = vmatprep.subr.mxu0 0.0
      %1778 = vmatpush1.msra.mxu0 0.0
      %1779 = vmatprep.subr.mxu0 0.0
      %1780 = vmatpush1.msra.mxu0 0.0
      %1781 = vmatprep.subr.mxu0 0.0
      %1782 = vmatpush1.msra.mxu0 0.0
      %1783 = vmatprep.subr.mxu0 0.0
      %1784 = vmatpush1.msra.mxu0 0.0
      %1785 = vmatprep.subr.mxu0 0.0
      %1786 = vmatpush1.msra.mxu0 0.0
      %1787 = vmatprep.subr.mxu0 0.0
      %1788 = vmatpush1.msra.mxu0 0.0
      %1789 = vmatprep.subr.mxu0 0.0
      %1790 = vmatpush1.msra.mxu0 0.0
      %1791 = vmatprep.subr.mxu0 0.0
      %1792 = vmatpush1.msra.mxu0 0.0
      %1793 = vmatprep.subr.mxu0 0.0
      %1794 = vmatpush1.msra.mxu0 0.0
      %1795 = vmatprep.subr.mxu0 0.0
      %1796 = vmatpush1.msra.mxu0 0.0
      %1797 = vmatprep.subr.mxu0 0.0
      %1798 = vmatpush1.msra.mxu0 0.0
      %1799 = vmatprep.subr.mxu0 0.0
      %1800 = vmatpush1.msra.mxu0 0.0
      %1801 = vmatprep.subr.mxu0 0.0
      %1802 = vmatpush1.msra.mxu0 0.0
      %1803 = vmatprep.subr.mxu0 0.0
      %1804 = vmatpush1.msra.mxu0 0.0
      %1805 = vmatprep.subr.mxu0 0.0
      %1806 = vmatpush1.msra.mxu0 0.0
      %1807 = vmatprep.subr.mxu0 0.0
      %1808 = vmatpush1.msra.mxu0 0.0
      %1809 = vmatprep.subr.mxu0 0.0
      %1810 = vmatpush1.msra.mxu0 0.0
      %1811 = vmatprep.subr.mxu0 0.0
      %1812 = vmatpush1.msra.mxu0 0.0
      %1813 = vmatprep.subr.mxu0 0.0
      %1814 = vmatpush1.msra.mxu0 0.0
      %1815 = vmatprep.mubr.f32.mxu0 0.0
      %1816 = vmatmul.mubr.f32.gmra.mrb[0].mxu0 %v1746
      %v1817 = vpop.f32.mrb[0].mxu0
      %v1818 = vadd.f32 %v1743, %v1817
      %v1819 = vpop.f32.mrb[0].mxu0
      %1820 = vmatprep.mubr.f32.mxu0 0.0
      %1821 = vmatmul.mubr.f32.gmra.mrb[0].mxu0 %v1749
      %v1822 = vpop.f32.mrb[0].mxu0
      %v1823 = vadd.f32 %v1743, %v1822
      %v1824 = vpop.f32.mrb[0].mxu0
      %1825 = vdwg.mxu0
      %v1826 = vmul.f32 %v1818, 0.5
      %v1827 = vmul.f32 %v1823, 0.5
      %v1828 = vmul.f32 %v1818, 0.70710677
      %v1829 = vmul.f32 %v1823, 0.70710677
      %vm1830 = vcmp.ge.f32.partialorder %v1828, 0.0
      %vm1831 = vcmp.ge.f32.partialorder %v1829, 0.0
      %v1832 = vsel %vm1830, 1.0, -1.0
      %v1833 = vsel %vm1831, 1.0, -1.0
      %v1834 = vand.u32 2147483647, %v1828
      %v1835 = vand.u32 2147483647, %v1829
      %v1836 = vmul.f32 %v1834, 0.3275911
      %v1837 = vmul.f32 %v1835, 0.3275911
      %v1838 = vadd.f32 %v1836, 1.0
      %v1839 = vadd.f32 %v1837, 1.0
      %v1840 = vrcp.pop %v1838
      %v1841 = vmul.f32 1.0, %v1840
      %v1842 = vrcp.pop %v1839
      %v1843 = vmul.f32 1.0, %v1842
      %v1844 = vmul.f32 %v1841, 1.0614054
      %v1845 = vmul.f32 %v1843, 1.0614054
      %v1846 = vadd.f32 %v1844, -1.4531521
      %v1847 = vadd.f32 %v1845, -1.4531521
      %v1848 = vmul.f32 %v1846, %v1841
      %v1849 = vmul.f32 %v1847, %v1843
      %v1850 = vadd.f32 %v1848, 1.4214138
      %v1851 = vadd.f32 %v1849, 1.4214138
      %v1852 = vmul.f32 %v1850, %v1841
      %v1853 = vmul.f32 %v1851, %v1843
      %v1854 = vadd.f32 %v1852, -0.28449672
      %v1855 = vadd.f32 %v1853, -0.28449672
      %v1856 = vmul.f32 %v1854, %v1841
      %v1857 = vmul.f32 %v1855, %v1843
      %v1858 = vadd.f32 %v1856, 0.2548296
      %v1859 = vadd.f32 %v1857, 0.2548296
      %v1860 = vmul.f32 %v1858, %v1841
      %v1861 = vmul.f32 %v1859, %v1843
      %v1862 = vsub.f32 0.0, %v1834
      %v1863 = vsub.f32 0.0, %v1835
      %v1864 = vmul.f32 %v1862, %v1834
      %v1865 = vmul.f32 %v1863, %v1835
      %v1866 = vmul.f32 %v1864, 1.442695
      %v1867 = vpow.pop %v1866
      %v1868 = vmul.f32 %v1865, 1.442695
      %v1869 = vpow.pop %v1868
      %v1870 = vmul.f32 %v1860, %v1867
      %v1871 = vmul.f32 %v1861, %v1869
      %v1872 = vsub.f32 1.0, %v1870
      %v1873 = vsub.f32 1.0, %v1871
      %v1874 = vmul.f32 %v1832, %v1872
      %v1875 = vmul.f32 %v1833, %v1873
      %v1876 = vadd.f32 %v1874, 1.0
      %v1877 = vadd.f32 %v1875, 1.0
      %v1878 = vmul.f32 %v1826, %v1876
      %v1879 = vmul.f32 %v1827, %v1877
      %v1880 = vld [vmem:[%s669] sm:$0xff]
      %v1881 = vld [vmem:[%s669 + $0x8] sm:$0xff]
      %v1882 = vld [vmem:[%s669 + $0x10] sm:$0xff]
      %v1883 = vld [vmem:[%s669 + $0x18] sm:$0xff]
      %v1884 = vld [vmem:[%s669 + $0x20] sm:$0xff]
      %v1885 = vld [vmem:[%s669 + $0x28] sm:$0xff]
      %v1886 = vld [vmem:[%s669 + $0x30] sm:$0xff]
      %v1887 = vld [vmem:[%s669 + $0x38] sm:$0xff]
      %v1888 = vld [vmem:[%s672] sm:$0x1]
      %v1890 = vlaneseq
      %v1891 = vshrl.u32 %v1890, 7
      %v1892 = vsub.s32 0, %v1891
      %v1893 = vrot.slane %v1888, %v1892
      %vm1895 = vcmask 523264
      %v1897 = vsel %vm1895, %v1878, 0
      %v1900 = vsel %vm1895, %v1879, 0
      %1902 = vmatprep.subr.mxu0 0.0
      %1903 = vmatpush1.msra.mxu0 %v1880
      %1904 = vmatprep.subr.mxu0 0.0
      %1905 = vmatpush1.msra.mxu0 %v1881
      %1906 = vmatprep.subr.mxu0 0.0
      %1907 = vmatpush1.msra.mxu0 %v1882
      %1908 = vmatprep.subr.mxu0 0.0
      %1909 = vmatpush1.msra.mxu0 %v1883
      %1910 = vmatprep.subr.mxu0 0.0
      %1911 = vmatpush1.msra.mxu0 %v1884
      %1912 = vmatprep.subr.mxu0 0.0
      %1913 = vmatpush1.msra.mxu0 %v1885
      %1914 = vmatprep.subr.mxu0 0.0
      %1915 = vmatpush1.msra.mxu0 %v1886
      %1916 = vmatprep.subr.mxu0 0.0
      %1917 = vmatpush1.msra.mxu0 %v1887
      %1918 = vmatprep.subr.mxu0 0.0
      %1919 = vmatpush1.msra.mxu0 0.0
      %1920 = vmatprep.subr.mxu0 0.0
      %1921 = vmatpush1.msra.mxu0 0.0
      %1922 = vmatprep.subr.mxu0 0.0
      %1923 = vmatpush1.msra.mxu0 0.0
      %1924 = vmatprep.subr.mxu0 0.0
      %1925 = vmatpush1.msra.mxu0 0.0
      %1926 = vmatprep.subr.mxu0 0.0
      %1927 = vmatpush1.msra.mxu0 0.0
      %1928 = vmatprep.subr.mxu0 0.0
      %1929 = vmatpush1.msra.mxu0 0.0
      %1930 = vmatprep.subr.mxu0 0.0
      %1931 = vmatpush1.msra.mxu0 0.0
      %1932 = vmatprep.subr.mxu0 0.0
      %1933 = vmatpush1.msra.mxu0 0.0
      %1934 = vmatprep.subr.mxu0 0.0
      %1935 = vmatpush1.msra.mxu0 0.0
      %1936 = vmatprep.subr.mxu0 0.0
      %1937 = vmatpush1.msra.mxu0 0.0
      %1938 = vmatprep.subr.mxu0 0.0
      %1939 = vmatpush1.msra.mxu0 0.0
      %1940 = vmatprep.subr.mxu0 0.0
      %1941 = vmatpush1.msra.mxu0 0.0
      %1942 = vmatprep.subr.mxu0 0.0
      %1943 = vmatpush1.msra.mxu0 0.0
      %1944 = vmatprep.subr.mxu0 0.0
      %1945 = vmatpush1.msra.mxu0 0.0
      %1946 = vmatprep.subr.mxu0 0.0
      %1947 = vmatpush1.msra.mxu0 0.0
      %1948 = vmatprep.subr.mxu0 0.0
      %1949 = vmatpush1.msra.mxu0 0.0
      %1950 = vmatprep.subr.mxu0 0.0
      %1951 = vmatpush1.msra.mxu0 0.0
      %1952 = vmatprep.subr.mxu0 0.0
      %1953 = vmatpush1.msra.mxu0 0.0
      %1954 = vmatprep.subr.mxu0 0.0
      %1955 = vmatpush1.msra.mxu0 0.0
      %1956 = vmatprep.subr.mxu0 0.0
      %1957 = vmatpush1.msra.mxu0 0.0
      %1958 = vmatprep.subr.mxu0 0.0
      %1959 = vmatpush1.msra.mxu0 0.0
      %1960 = vmatprep.subr.mxu0 0.0
      %1961 = vmatpush1.msra.mxu0 0.0
      %1962 = vmatprep.subr.mxu0 0.0
      %1963 = vmatpush1.msra.mxu0 0.0
      %1964 = vmatprep.subr.mxu0 0.0
      %1965 = vmatpush1.msra.mxu0 0.0
      %1966 = vmatprep.mubr.f32.mxu0 0.0
      %1967 = vmatmul.mubr.f32.gmra.mrb[0].mxu0 %v1897
      %v1968 = vpop.f32.mrb[0].mxu0
      %v1969 = vadd.f32 %v1893, %v1968
      %v1970 = vpop.f32.mrb[0].mxu0
      %1971 = vmatprep.mubr.f32.mxu0 0.0
      %1972 = vmatmul.mubr.f32.gmra.mrb[0].mxu0 %v1900
      %v1973 = vpop.f32.mrb[0].mxu0
      %v1974 = vadd.f32 %v1893, %v1973
      %v1975 = vpop.f32.mrb[0].mxu0
      %1976 = vdwg.mxu0
      %v1977 = vadd.f32 %v1732, %v1969
      %v1978 = vadd.f32 %v1733, %v1974
      %v1979 = vld [vmem:[%s675] sm:$0x1]
      %v1980 = vld [vmem:[%s678] sm:$0x1]
      %v1981 = vsel %vm746, %v1977, 0.0
      %1982 = vadd.xlane.f32.xlu0 %v1981
      %v1983 = vpop.xlane.xlu0 %1982
      %v1984 = vsel %vm746, %v1978, 0.0
      %1985 = vadd.xlane.f32.xlu0 %v1984
      %v1986 = vpop.xlane.xlu0 %1985
      %v1987 = vmul.f32 %v1983, %v1697
      %v1988 = vmul.f32 %v1986, %v1697
      %v1989 = vsub.f32 %v1977, %v1987
      %v1990 = vsub.f32 %v1978, %v1988
      %v1991 = vmul.f32 %v1989, %v1989
      %v1992 = vmul.f32 %v1990, %v1990
      %v1993 = vsel %vm746, %v1991, 0.0
      %1994 = vadd.xlane.f32.xlu0 %v1993
      %v1995 = vpop.xlane.xlu0 %1994
      %v1996 = vsel %vm746, %v1992, 0.0
      %1997 = vadd.xlane.f32.xlu0 %v1996
      %v1998 = vpop.xlane.xlu0 %1997
      %v1999 = vmul.f32 %v1995, %v1697
      %v2000 = vmul.f32 %v1998, %v1697
      %v2001 = vadd.f32 %v1999, 1e-12
      %v2002 = vadd.f32 %v2000, 1e-12
      %v2003 = vrsqrt.pop %v2001
      %v2004 = vrsqrt.pop %v2002
      %v2005 = vmul.f32 %v1989, %v2003
      %v2006 = vmul.f32 %v1990, %v2004
      %v2008 = vlaneseq
      %v2009 = vshrl.u32 %v2008, 7
      %v2010 = vsub.s32 0, %v2009
      %v2011 = vrot.slane %v1979, %v2010
      %v2013 = vmul.f32 %v2005, %v2011
      %v2014 = vmul.f32 %v2006, %v2011
      %v2016 = vlaneseq
      %v2017 = vshrl.u32 %v2016, 7
      %v2018 = vsub.s32 0, %v2017
      %v2019 = vrot.slane %v1980, %v2018
      %v2021 = vadd.f32 %v2013, %v2019
      %v2022 = vadd.f32 %v2014, %v2019
      %2023 = vst.msk [vmem:[%s16] sm:$0xff] %vm746, %v2021
      %2024 = vst.msk [vmem:[%s16 + $0x8] sm:$0xff] %vm746, %v2022
      // Predicated region
      $region89: #{kcbert_forward.2} parent=83 // pred_check
        %p2025 = pneg %p436
      $region90: #{kcbert_forward.2} parent=83 // pred_check_branch
        %2027 = sbr.rel (%p2025) target = $region92
      $region91: #{kcbert_forward.2} parent=83 // pred_region
        _
      $region92: #{kcbert_forward.2} parent=83 // pred_fallthru
        _
      // Predicated region
      $region93: #{kcbert_forward.2} parent=83 // pred_check
        %p2028 = pneg %p436
      $region94: #{kcbert_forward.2} parent=83 // pred_check_branch
        %2030 = sbr.rel (%p2028) target = $region96
      $region95: #{kcbert_forward.2} parent=83 // pred_region
        _
      $region96: #{kcbert_forward.2} parent=83 // pred_fallthru
        _
    $region84: #{kcbert_forward.2} parent=5 // pred_fallthru
      _
    %p2031 = scmp.le.s32.totalorder 2, %s22
    // Predicated region
    $region97: #{kcbert_forward.2} parent=5 // pred_check
      %p2032 = pneg %p2031
    $region98: #{kcbert_forward.2} parent=5 // pred_check_branch
      %2034 = sbr.rel (%p2032) target = $region100
    $region99: #{kcbert_forward.2} parent=5 // pred_region
      %s2035 = ssub.s32 %s22, 2
    $region100: #{kcbert_forward.2} parent=5 // pred_fallthru
      _
  $region6: #{kcbert_forward.2} parent=0 // loop_footer
    %s26 = sadd.s32 1, %s22
  $region7: #{kcbert_forward.2} parent=0 // loop_footer_branch
    %21 = sbr.rel target = $region3
  $region8: #{kcbert_forward.2} parent=0 // loop_exit
    _

</llo_original>
